<compile_context>
chip_gen: v6e
topology: v6e:2x2x1
jax: 0.10.0
libtpu: 0.0.40
codegen_flags: <defaults>
</compile_context>

<pallas_src>
import functools
import math

import jax
import jax.numpy as jnp
from jax.experimental import pallas as pl
from jax.experimental.pallas import tpu as pltpu

EPS = 1e-5


# ------------------------------ tiling helpers -------------------------------

def _pick_divisor(m, target):
    """Largest divisor of m that is <= target and (a multiple of 8 or == m)."""
    target = max(1, min(int(target), m))
    for t in range(target, 0, -1):
        if m % t == 0 and (t % 8 == 0 or t == m):
            return t
    return m


def _pick_row_tile(m, cap=512):
    """Row tile for (rows, cols) elementwise / matmul slabs; prefers >= 2 grid steps."""
    if m >= 16:
        return _pick_divisor(m, min(cap, m // 2))
    return m


def _pick_th(ho, wo, cap_rows):
    """Output-row tile for the conv kernel: th | Ho, th*Wo <= cap_rows, th*Wo % 8 == 0."""
    best = None
    for t in range(ho, 0, -1):
        if ho % t:
            continue
        if t * wo <= cap_rows and (t * wo) % 8 == 0:
            return t
        if best is None and t * wo <= cap_rows:
            best = t
    return best if best is not None else ho


def _lane_fold(m, c, max_f=4096):
    """Smallest f | m with f*c >= 128 so (m, c) can be viewed lane-dense as (m//f, f*c)."""
    if c >= 128:
        return 1
    lo = -(-128 // c)
    for f in range(lo, min(m, max_f) + 1):
        if m % f == 0:
            return f
    for f in range(min(m, lo), 0, -1):       # cannot reach 128 lanes: best-effort fold
        if m % f == 0:
            return f
    return 1


# -------------------- conv kernels (fused BN-stat partials) -------------------

def _conv3x3_kernel(ph_ref, w_ref, o_ref, st_ref, *, s, th, wo, cin, cout, fold_k):
    """3x3 conv over the phase-decomposed padded input + per-block BN partials.

    ph_ref : (s*s, R, Rc, Cin)  phases of one image (phase p = (kh%s)*s + (kw%s))
    w_ref  : (9*Cin, Cout)      weights in (kh, kw, cin)-major order
    o_ref  : (th*Wo, Cout)      conv output rows for this block (MXU/out dtype)
    st_ref : (1, 2, Cout)       row0 = per-channel sum, row1 = per-channel sum of squares
    """
    i = pl.program_id(1)
    r0 = i * th
    if th % 8 == 0:
        r0 = pl.multiple_of(r0, 8)
    taps = []
    for kh in range(3):
        for kw in range(3):
            p = (kh % s) * s + (kw % s)
            tap = ph_ref[p, pl.ds(r0 + kh // s, th), pl.ds(kw // s, wo), :]
            taps.append(tap.reshape(th * wo, cin))
    if fold_k:
        # im2col assembled in registers: one MXU dot with K = 9*Cin.
        a = jnp.concatenate(taps, axis=-1)
        acc = jnp.dot(a, w_ref[...], preferred_element_type=jnp.float32)
    else:
        # proven fallback: nine K=Cin dots accumulated on the VPU.
        acc = jnp.zeros((th * wo, cout), jnp.float32)
        for t, a in enumerate(taps):
            acc = acc + jnp.dot(a, w_ref[pl.ds(t * cin, cin), :],
                                preferred_element_type=jnp.float32)
    o_ref[...] = acc.astype(o_ref.dtype)                 # bf16 store on the perf path
    st_ref[0] = jnp.concatenate(
        [jnp.sum(acc, axis=0, keepdims=True),
         jnp.sum(acc * acc, axis=0, keepdims=True)], axis=0)


_FOLD_K_OK = {"v": None}   # one-time probe: does the lane-dim concat lower on this toolchain?


def _phase_decompose(x_nhwc, stride, mxu_dtype):
    """Pad (top/left=1, enough bottom/right) and space-to-depth so each of the 9 conv taps
    is a contiguous in-kernel slice of one of the s*s phase planes."""
    N, H, W, Cin = x_nhwc.shape
    s = int(stride)
    Ho = (H + 2 - 3) // s + 1
    Wo = (W + 2 - 3) // s + 1
    halo = 2 // s                                # max(kh // s): extra rows/cols per phase
    R, Rc = Ho + halo, Wo + halo
    xp = jnp.pad(x_nhwc, ((0, 0), (1, s * R - H - 1), (1, s * Rc - W - 1), (0, 0)))
    ph = xp.reshape(N, R, s, Rc, s, Cin).transpose(0, 2, 4, 1, 3, 5)
    ph = ph.reshape(N * s * s, R, Rc, Cin).astype(mxu_dtype)
    return ph, (N, Ho, Wo, Cin, R, Rc, s)


def _fold_weights(w_oihw, mxu_dtype):
    """(Cout, Cin, 3, 3) -> (9*Cin, Cout) in (kh, kw, cin)-major order (matches tap concat)."""
    Cout, Cin = w_oihw.shape[0], w_oihw.shape[1]
    return jnp.transpose(w_oihw, (2, 3, 1, 0)).reshape(9 * Cin, Cout).astype(mxu_dtype)


def _conv3x3_call(ph, wk, dims, out_dtype, fold_k):
    N, Ho, Wo, Cin, R, Rc, s = dims
    Cout = wk.shape[-1]
    # Keep the f32 accumulator <= ~128 KiB -> register/VMEM friendly on every generation
    # (incl. v7x's 64 MiB physical / 32 MiB scoped VMEM).
    cap_rows = max(Wo, (128 << 10) // (4 * Cout))
    th = _pick_th(Ho, Wo, cap_rows)
    n_rb = Ho // th
    if (N * n_rb) % 2 == 1:
        # v7x has 2 TensorCores: prefer an even number of parallel grid steps.
        for t in range(th - 1, 0, -1):
            if Ho % t or (t * Wo) % 8 or t * Wo > cap_rows:
                continue
            if (N * (Ho // t)) % 2 == 0:
                th, n_rb = t, Ho // t
                break
    if (th * Wo) % 8 != 0 and N * n_rb != 1:
        # TODO(synk): ragged Ho*Wo (not a multiple of 8) would need masked output stores.
        raise ValueError(f"unsupported ragged conv tile: th*Wo={th * Wo} with {N * n_rb} blocks")
    M = N * Ho * Wo
    G = N * n_rb
    # TODO(synk): for very large feature maps, slice the phase input along output rows with a
    # halo'd BlockSpec instead of keeping the whole-image phase block resident.
    kern = functools.partial(_conv3x3_kernel, s=s, th=th, wo=Wo, cin=Cin, cout=Cout,
                             fold_k=fold_k)
    return pl.pallas_call(
        kern,
        out_shape=(jax.ShapeDtypeStruct((M, Cout), out_dtype),
                   jax.ShapeDtypeStruct((G, 2, Cout), jnp.float32)),
        grid=(N, n_rb),
        in_specs=[
            pl.BlockSpec((s * s, R, Rc, Cin), lambda n, i: (n, 0, 0, 0)),
            pl.BlockSpec((9 * Cin, Cout), lambda n, i: (0, 0)),
        ],
        out_specs=(
            pl.BlockSpec((th * Wo, Cout), lambda n, i: (n * n_rb + i, 0)),
            pl.BlockSpec((1, 2, Cout), lambda n, i: (n * n_rb + i, 0, 0)),
        ),
        compiler_params=pltpu.CompilerParams(
            dimension_semantics=("parallel", "parallel")),
    )(ph, wk)


def conv3x3_bn_stats_from_phases(ph, wk, dims, out_dtype):
    """Prefer the K-folded single-dot kernel; fall back to the proven 9-dot kernel once if
    the lane-dim concat does not lower on this toolchain."""
    if _FOLD_K_OK["v"] is not False:
        try:
            res = _conv3x3_call(ph, wk, dims, out_dtype, fold_k=True)
            if _FOLD_K_OK["v"] is None:
                jax.block_until_ready(res)
            _FOLD_K_OK["v"] = True
            return res
        except Exception:
            _FOLD_K_OK["v"] = False
    return _conv3x3_call(ph, wk, dims, out_dtype, fold_k=False)


def conv3x3_bn_stats(x_nhwc, w_oihw, stride, mxu_dtype):
    ph, dims = _phase_decompose(x_nhwc, stride, mxu_dtype)
    wk = _fold_weights(w_oihw, mxu_dtype)
    out, stats = conv3x3_bn_stats_from_phases(ph, wk, dims, mxu_dtype)
    return out, stats, (dims[0], dims[1], dims[2], wk.shape[-1])


def _matmul_stats_kernel(a_ref, w_ref, o_ref, st_ref):
    acc = jnp.dot(a_ref[...], w_ref[...], preferred_element_type=jnp.float32)
    o_ref[...] = acc.astype(o_ref.dtype)
    st_ref[0] = jnp.concatenate(
        [jnp.sum(acc, axis=0, keepdims=True),
         jnp.sum(acc * acc, axis=0, keepdims=True)], axis=0)


def conv1x1_bn_stats(x_nhwc, w_oihw, stride, mxu_dtype):
    """1x1 conv (pad=0, no bias) shortcut -> (M, Cout) slab + per-block BN stat partials."""
    N, H, W, Cin = x_nhwc.shape
    Cout = w_oihw.shape[0]
    xs = x_nhwc[:, ::stride, ::stride, :]
    Ho, Wo = xs.shape[1], xs.shape[2]
    M = N * Ho * Wo
    a = xs.reshape(M, Cin).astype(mxu_dtype)
    wk = jnp.transpose(w_oihw, (2, 3, 1, 0)).reshape(Cin, Cout).astype(mxu_dtype)

    tm = _pick_row_tile(M, max(8, (128 << 10) // (4 * Cout)))
    G = M // tm
    out, stats = pl.pallas_call(
        _matmul_stats_kernel,
        out_shape=(jax.ShapeDtypeStruct((M, Cout), mxu_dtype),
                   jax.ShapeDtypeStruct((G, 2, Cout), jnp.float32)),
        grid=(G,),
        in_specs=[pl.BlockSpec((tm, Cin), lambda i: (i, 0)),
                  pl.BlockSpec((Cin, Cout), lambda i: (0, 0))],
        out_specs=(pl.BlockSpec((tm, Cout), lambda i: (i, 0)),
                   pl.BlockSpec((1, 2, Cout), lambda i: (i, 0, 0))),
        compiler_params=pltpu.CompilerParams(dimension_semantics=("parallel",)),
    )(a, wk)
    return out, stats, (N, Ho, Wo, Cout)


# ----------- fused BN1 finalize+apply + ReLU + zero-pad (conv2 input prep) -----------

def _bn_relu_pad_kernel(x_ref, tot_ref, g_ref, b_ref, o_ref, *, ho, wo, c, inv_count):
    mean = tot_ref[0:1, :] * inv_count
    var = tot_ref[1:2, :] * inv_count - mean * mean          # biased (PyTorch training BN)
    scale = g_ref[...] * jax.lax.rsqrt(jnp.maximum(var, 0.0) + EPS)
    shift = b_ref[...] - mean * scale
    y = jnp.maximum(x_ref[0].astype(jnp.float32) * scale + shift, 0.0)
    o_ref[...] = jnp.zeros_like(o_ref)                       # zero halo
    o_ref[0, 1:1 + ho, 1:1 + wo, :] = y.reshape(ho, wo, c).astype(o_ref.dtype)


def bn_relu_pad(out1, stats1, gamma, beta, N, Ho, Wo, C, out_dtype):
    """(M, C) conv1 slab -> (N, Ho+2, Wo+2, C) padded BN+ReLU'd buffer, i.e. exactly the
    stride-1 phase decomposition conv2 reads (no separate bn_apply pass, no XLA pad copy)."""
    M = N * Ho * Wo
    tot = jnp.sum(stats1, axis=0)                            # (2, C): tiny XLA reduce
    x3 = out1.reshape(N, Ho * Wo, C)
    Hp, Wp = Ho + 2, Wo + 2
    return pl.pallas_call(
        functools.partial(_bn_relu_pad_kernel, ho=Ho, wo=Wo, c=C, inv_count=1.0 / M),
        out_shape=jax.ShapeDtypeStruct((N, Hp, Wp, C), out_dtype),
        grid=(N,),
        in_specs=[pl.BlockSpec((1, Ho * Wo, C), lambda n: (n, 0, 0)),
                  pl.BlockSpec((2, C), lambda n: (0, 0)),
                  pl.BlockSpec((1, C), lambda n: (0, 0)),
                  pl.BlockSpec((1, C), lambda n: (0, 0))],
        out_specs=pl.BlockSpec((1, Hp, Wp, C), lambda n: (n, 0, 0, 0)),
        compiler_params=pltpu.CompilerParams(dimension_semantics=("parallel",)),
    )(x3, tot, gamma.reshape(1, C), beta.reshape(1, C))


# ------ fused tail: BN2 finalize+apply, shortcut BN finalize+apply, add, final ReLU ------

def _residual_tail_kernel(out2_ref, tot2_ref, g2_ref, b2_ref, short_ref, *rest,
                          bn_short, inv_count):
    if bn_short:
        totsc_ref, gsc_ref, bsc_ref, o_ref = rest
    else:
        (o_ref,) = rest

    def affine(tot_ref, g_ref, b_ref):
        mean = tot_ref[0:1, :] * inv_count
        var = tot_ref[1:2, :] * inv_count - mean * mean
        scale = g_ref[...] * jax.lax.rsqrt(jnp.maximum(var, 0.0) + EPS)
        return scale, b_ref[...] - mean * scale

    sc2, sh2 = affine(tot2_ref, g2_ref, b2_ref)
    y = out2_ref[...].astype(jnp.float32) * sc2 + sh2
    if bn_short:
        scs, shs = affine(totsc_ref, gsc_ref, bsc_ref)
        y = y + short_ref[...].astype(jnp.float32) * scs + shs
    else:
        y = y + short_ref[...].astype(jnp.float32)
    o_ref[...] = jnp.maximum(y, 0.0).astype(o_ref.dtype)


def residual_tail(out2, stats2, g2, b2, short, stats_sc=None, gsc=None, bsc=None, *,
                  count, out_dtype=jnp.float32):
    """Lane-dense fused tail: (M, C) slabs are reinterpreted as (M/f, f*C) with f*C >= 128
    (identical memory layout); per-channel stats/gamma/beta are tiled to the folded width so
    loads/stores are unmasked even when C < 128."""
    M, C = out2.shape
    f = _lane_fold(M, C)
    rows, cols = M // f, f * C
    tm = _pick_row_tile(rows)

    def fold(x):            # (M, C) -> (rows, cols): pure reinterpretation
        return x.reshape(rows, cols)

    def tile(x):            # (k, C) -> (k, cols): per-channel values repeated per folded pixel
        return jnp.tile(x, (1, f))

    big = pl.BlockSpec((tm, cols), lambda i: (i, 0))
    st = pl.BlockSpec((2, cols), lambda i: (0, 0))
    row = pl.BlockSpec((1, cols), lambda i: (0, 0))
    bn_short = stats_sc is not None

    args = [fold(out2), tile(jnp.sum(stats2, axis=0)),
            tile(g2.reshape(1, C)), tile(b2.reshape(1, C)), fold(short)]
    in_specs = [big, st, row, row, big]
    if bn_short:
        args += [tile(jnp.sum(stats_sc, axis=0)),
                 tile(gsc.reshape(1, C)), tile(bsc.reshape(1, C))]
        in_specs += [st, row, row]

    y = pl.pallas_call(
        functools.partial(_residual_tail_kernel, bn_short=bn_short, inv_count=1.0 / count),
        out_shape=jax.ShapeDtypeStruct((rows, cols), out_dtype),
        grid=(rows // tm,),
        in_specs=in_specs,
        out_specs=big,
        compiler_params=pltpu.CompilerParams(dimension_semantics=("parallel",)),
    )(*args)
    return y.reshape(M, C)


# --------------------------------- SimpleBlock --------------------------------

class SimpleBlockPallas:
    def __init__(self, indim, outdim, half_res, key, mxu_dtype=jnp.bfloat16):
        self.indim, self.outdim, self.half_res = indim, outdim, half_res
        self.mxu_dtype = mxu_dtype
        k1, k2, k3 = jax.random.split(key, 3)
        # init_layer: normal(0, sqrt(2 / (kh*kw*out_channels)))
        std3 = math.sqrt(2.0 / (3 * 3 * outdim))
        self.w1 = (jax.random.normal(k1, (outdim, indim, 3, 3)) * std3).astype(jnp.float32)
        self.w2 = (jax.random.normal(k2, (outdim, outdim, 3, 3)) * std3).astype(jnp.float32)
        self.g1 = jnp.ones((outdim,), jnp.float32)
        self.b1 = jnp.zeros((outdim,), jnp.float32)
        self.g2 = jnp.ones((outdim,), jnp.float32)
        self.b2 = jnp.zeros((outdim,), jnp.float32)
        if indim != outdim:
            std1 = math.sqrt(2.0 / (1 * 1 * outdim))
            self.wsc = (jax.random.normal(k3, (outdim, indim, 1, 1)) * std1).astype(jnp.float32)
            self.gsc = jnp.ones((outdim,), jnp.float32)
            self.bsc = jnp.zeros((outdim,), jnp.float32)
            self.shortcut_type = '1x1'
        else:
            self.shortcut_type = 'identity'

    def forward_nhwc(self, x_nhwc, out_dtype=jnp.float32):
        """NHWC path (use when chaining blocks; pass out_dtype=bf16 to halve the final write)."""
        x = x_nhwc.astype(jnp.float32)
        s1 = 2 if self.half_res else 1

        # conv1 (+ fused BN1 stat partials)
        out1, st1, (N, Ho, Wo, C) = conv3x3_bn_stats(x, self.w1, s1, self.mxu_dtype)
        M = N * Ho * Wo

        # fused BN1 finalize+apply + ReLU + zero-pad -> conv2's stride-1 phase buffer
        ph2 = bn_relu_pad(out1, st1, self.g1, self.b1, N, Ho, Wo, C, self.mxu_dtype)

        # conv2 (+ fused BN2 stat partials) straight from the padded buffer
        dims2 = (N, Ho, Wo, C, Ho + 2, Wo + 2, 1)
        wk2 = _fold_weights(self.w2, self.mxu_dtype)
        out2, st2 = conv3x3_bn_stats_from_phases(ph2, wk2, dims2, self.mxu_dtype)

        # fused tail: BN2 finalize+apply (+ shortcut BN finalize+apply) + residual add + ReLU
        if self.shortcut_type == 'identity':
            if self.half_res:
                raise ValueError("identity shortcut with half_res=True is shape-mismatched "
                                 "(same limitation as the PyTorch module)")
            y = residual_tail(out2, st2, self.g2, self.b2, x.reshape(M, C),
                              count=M, out_dtype=out_dtype)
        else:
            short, st_sc, _ = conv1x1_bn_stats(x, self.wsc, s1, self.mxu_dtype)
            y = residual_tail(out2, st2, self.g2, self.b2, short,
                              st_sc, self.gsc, self.bsc, count=M, out_dtype=out_dtype)
        return y.reshape(N, Ho, Wo, C)

    def __call__(self, x_nchw):
        # NCHW in / NCHW out (PyTorch convention); boundary transposes are XLA glue.
        x = jnp.transpose(x_nchw.astype(jnp.float32), (0, 2, 3, 1))
        y = self.forward_nhwc(x)
        return jnp.transpose(y, (0, 3, 1, 2))


# ------------------------------ reference (JAX) -------------------------------

def ref_forward(block, x_nchw):
    def conv(x, w, stride, pad):
        return jax.lax.conv_general_dilated(
            x, w, (stride, stride), ((pad, pad), (pad, pad)),
            dimension_numbers=('NCHW', 'OIHW', 'NCHW'))

    def bn(x, g, b):
        m = jnp.mean(x, axis=(0, 2, 3), keepdims=True)
        v = jnp.mean(jnp.square(x - m), axis=(0, 2, 3), keepdims=True)
        return (x - m) * jax.lax.rsqrt(v + EPS) * g.reshape(1, -1, 1, 1) + b.reshape(1, -1, 1, 1)

    s1 = 2 if block.half_res else 1
    out = jnp.maximum(bn(conv(x_nchw, block.w1, s1, 1), block.g1, block.b1), 0.0)
    out = bn(conv(out, block.w2, 1, 1), block.g2, block.b2)
    if block.shortcut_type == 'identity':
        short = x_nchw
    else:
        short = bn(conv(x_nchw, block.wsc, s1, 0), block.gsc, block.bsc)
    return jnp.maximum(out + short, 0.0)


# ----------------------------------- main --------------------------------------

if __name__ == "__main__":
    key = jax.random.PRNGKey(0)
    kx, kp, kx2, kp2 = jax.random.split(key, 4)

    # Config 1: SimpleBlock(4, 8, half_res=True)  -> 1x1-conv shortcut path.
    N, indim, outdim, H, W = 2, 4, 8, 16, 16
    x = jax.random.normal(kx, (N, indim, H, W), dtype=jnp.float32)

    # (a) exact-semantics check with f32 MXU operands / f32 intermediates.
    blk_f32 = SimpleBlockPallas(indim, outdim, True, kp, mxu_dtype=jnp.float32)
    y = jax.block_until_ready(blk_f32(x))
    y_ref = jax.block_until_ready(ref_forward(blk_f32, x))
    assert y.shape == y_ref.shape == (N, outdim, H // 2, W // 2)
    assert jnp.allclose(y, y_ref, atol=1e-3, rtol=1e-3), \
        f"f32 path max abs err {float(jnp.max(jnp.abs(y - y_ref)))}"

    # (b) default bf16 perf path (bf16 MXU operands AND bf16 intermediate slabs) -- loose
    #     tolerance vs the f32 reference.
    blk_bf16 = SimpleBlockPallas(indim, outdim, True, kp, mxu_dtype=jnp.bfloat16)
    y16 = jax.block_until_ready(blk_bf16(x))
    y16_ref = jax.block_until_ready(ref_forward(blk_bf16, x))
    assert jnp.allclose(y16, y16_ref, atol=1e-1, rtol=1e-1), \
        f"bf16 path max abs err {float(jnp.max(jnp.abs(y16 - y16_ref)))}"

    # Config 2: SimpleBlock(8, 8, half_res=False) -> identity shortcut path.
    N2, dim, H2, W2 = 2, 8, 8, 8
    x2 = jax.random.normal(kx2, (N2, dim, H2, W2), dtype=jnp.float32)
    blk_id = SimpleBlockPallas(dim, dim, False, kp2, mxu_dtype=jnp.float32)
    y2 = jax.block_until_ready(blk_id(x2))
    y2_ref = jax.block_until_ready(ref_forward(blk_id, x2))
    assert y2.shape == y2_ref.shape == (N2, dim, H2, W2)
    assert jnp.allclose(y2, y2_ref, atol=1e-3, rtol=1e-3), \
        f"identity path max abs err {float(jnp.max(jnp.abs(y2 - y2_ref)))}"

    print("KERNEL_OK")
</pallas_src>

<mosaic_0001>
module attributes {stable_mosaic.version = 11 : i64} {
  func.func @_conv3x3_kernel(%arg0: i32, %arg1: i32, %arg2: memref<4x9x9x4xf32, #tpu.memory_space<vmem>>, %arg3: memref<36x8xf32, #tpu.memory_space<vmem>>, %arg4: memref<64x8xf32, #tpu.memory_space<vmem>>, %arg5: memref<1x2x8xf32, #tpu.memory_space<vmem>>) attributes {dimension_semantics = [#tpu.dimension_semantics<parallel>, #tpu.dimension_semantics<parallel>], iteration_bounds = array<i64: 2, 1>, scalar_prefetch = 0 : i64, scratch_operands = 0 : i64, tpu.core_type = #tpu.core_type<tc>, window_params = [{transform_indices = @transform_0, window_bounds = array<i64: 4, 9, 9, 4>}, {pipeline_mode = #tpu.pipeline_mode<synchronous>, transform_indices = @transform_1, window_bounds = array<i64: 36, 8>}, {transform_indices = @transform_2, window_bounds = array<i64: 64, 8>}, {transform_indices = @transform_3, window_bounds = array<i64: 1, 2, 8>}]} {
    %c8_i32 = arith.constant 8 : i32
    %0 = arith.muli %arg1, %c8_i32 : i32
    %1 = tpu.assume_multiple %0, 8 : i32
    %c0_i32 = arith.constant 0 : i32
    %2 = arith.addi %1, %c0_i32 : i32
    %c0 = arith.constant 0 : index
    %3 = arith.index_cast %2 : i32 to index
    %c0_0 = arith.constant 0 : index
    %c0_1 = arith.constant 0 : index
    %4 = vector.load %arg2[%c0, %3, %c0_0, %c0_1] : memref<4x9x9x4xf32, #tpu.memory_space<vmem>>, vector<1x8x8x4xf32>
    %5 = vector.shape_cast %4 : vector<1x8x8x4xf32> to vector<8x8x4xf32>
    %6 = vector.shape_cast %5 : vector<8x8x4xf32> to vector<64x4xf32>
    %c0_i32_2 = arith.constant 0 : i32
    %7 = arith.addi %1, %c0_i32_2 : i32
    %c1 = arith.constant 1 : index
    %8 = arith.index_cast %7 : i32 to index
    %c0_3 = arith.constant 0 : index
    %c0_4 = arith.constant 0 : index
    %9 = vector.load %arg2[%c1, %8, %c0_3, %c0_4] : memref<4x9x9x4xf32, #tpu.memory_space<vmem>>, vector<1x8x8x4xf32>
    %10 = vector.shape_cast %9 : vector<1x8x8x4xf32> to vector<8x8x4xf32>
    %11 = vector.shape_cast %10 : vector<8x8x4xf32> to vector<64x4xf32>
    %c0_i32_5 = arith.constant 0 : i32
    %12 = arith.addi %1, %c0_i32_5 : i32
    %c0_6 = arith.constant 0 : index
    %13 = arith.index_cast %12 : i32 to index
    %c1_7 = arith.constant 1 : index
    %c0_8 = arith.constant 0 : index
    %14 = vector.load %arg2[%c0_6, %13, %c1_7, %c0_8] : memref<4x9x9x4xf32, #tpu.memory_space<vmem>>, vector<1x8x8x4xf32>
    %15 = vector.shape_cast %14 : vector<1x8x8x4xf32> to vector<8x8x4xf32>
    %16 = vector.shape_cast %15 : vector<8x8x4xf32> to vector<64x4xf32>
    %c0_i32_9 = arith.constant 0 : i32
    %17 = arith.addi %1, %c0_i32_9 : i32
    %c2 = arith.constant 2 : index
    %18 = arith.index_cast %17 : i32 to index
    %c0_10 = arith.constant 0 : index
    %c0_11 = arith.constant 0 : index
    %19 = vector.load %arg2[%c2, %18, %c0_10, %c0_11] : memref<4x9x9x4xf32, #tpu.memory_space<vmem>>, vector<1x8x8x4xf32>
    %20 = vector.shape_cast %19 : vector<1x8x8x4xf32> to vector<8x8x4xf32>
    %21 = vector.shape_cast %20 : vector<8x8x4xf32> to vector<64x4xf32>
    %c0_i32_12 = arith.constant 0 : i32
    %22 = arith.addi %1, %c0_i32_12 : i32
    %c3 = arith.constant 3 : index
    %23 = arith.index_cast %22 : i32 to index
    %c0_13 = arith.constant 0 : index
    %c0_14 = arith.constant 0 : index
    %24 = vector.load %arg2[%c3, %23, %c0_13, %c0_14] : memref<4x9x9x4xf32, #tpu.memory_space<vmem>>, vector<1x8x8x4xf32>
    %25 = vector.shape_cast %24 : vector<1x8x8x4xf32> to vector<8x8x4xf32>
    %26 = vector.shape_cast %25 : vector<8x8x4xf32> to vector<64x4xf32>
    %c0_i32_15 = arith.constant 0 : i32
    %27 = arith.addi %1, %c0_i32_15 : i32
    %c2_16 = arith.constant 2 : index
    %28 = arith.index_cast %27 : i32 to index
    %c1_17 = arith.constant 1 : index
    %c0_18 = arith.constant 0 : index
    %29 = vector.load %arg2[%c2_16, %28, %c1_17, %c0_18] : memref<4x9x9x4xf32, #tpu.memory_space<vmem>>, vector<1x8x8x4xf32>
    %30 = vector.shape_cast %29 : vector<1x8x8x4xf32> to vector<8x8x4xf32>
    %31 = vector.shape_cast %30 : vector<8x8x4xf32> to vector<64x4xf32>
    %c1_i32 = arith.constant 1 : i32
    %32 = arith.addi %1, %c1_i32 : i32
    %c0_19 = arith.constant 0 : index
    %33 = arith.index_cast %32 : i32 to index
    %c0_20 = arith.constant 0 : index
    %c0_21 = arith.constant 0 : index
    %34 = vector.load %arg2[%c0_19, %33, %c0_20, %c0_21] : memref<4x9x9x4xf32, #tpu.memory_space<vmem>>, vector<1x8x8x4xf32>
    %35 = vector.shape_cast %34 : vector<1x8x8x4xf32> to vector<8x8x4xf32>
    %36 = vector.shape_cast %35 : vector<8x8x4xf32> to vector<64x4xf32>
    %c1_i32_22 = arith.constant 1 : i32
    %37 = arith.addi %1, %c1_i32_22 : i32
    %c1_23 = arith.constant 1 : index
    %38 = arith.index_cast %37 : i32 to index
    %c0_24 = arith.constant 0 : index
    %c0_25 = arith.constant 0 : index
    %39 = vector.load %arg2[%c1_23, %38, %c0_24, %c0_25] : memref<4x9x9x4xf32, #tpu.memory_space<vmem>>, vector<1x8x8x4xf32>
    %40 = vector.shape_cast %39 : vector<1x8x8x4xf32> to vector<8x8x4xf32>
    %41 = vector.shape_cast %40 : vector<8x8x4xf32> to vector<64x4xf32>
    %c1_i32_26 = arith.constant 1 : i32
    %42 = arith.addi %1, %c1_i32_26 : i32
    %c0_27 = arith.constant 0 : index
    %43 = arith.index_cast %42 : i32 to index
    %c1_28 = arith.constant 1 : index
    %c0_29 = arith.constant 0 : index
    %44 = vector.load %arg2[%c0_27, %43, %c1_28, %c0_29] : memref<4x9x9x4xf32, #tpu.memory_space<vmem>>, vector<1x8x8x4xf32>
    %45 = vector.shape_cast %44 : vector<1x8x8x4xf32> to vector<8x8x4xf32>
    %46 = vector.shape_cast %45 : vector<8x8x4xf32> to vector<64x4xf32>
    %47 = tpu.concatenate %6, %11, %16, %21, %26, %31, %36, %41, %46 in 1 : vector<64x4xf32>, vector<64x4xf32>, vector<64x4xf32>, vector<64x4xf32>, vector<64x4xf32>, vector<64x4xf32>, vector<64x4xf32>, vector<64x4xf32>, vector<64x4xf32> -> vector<64x36xf32>
    %c0_30 = arith.constant 0 : index
    %c0_31 = arith.constant 0 : index
    %48 = vector.load %arg3[%c0_30, %c0_31] : memref<36x8xf32, #tpu.memory_space<vmem>>, vector<36x8xf32>
    %cst = arith.constant dense<0.000000e+00> : vector<64x8xf32>
    %49 = tpu.matmul %47, %48, %cst {dimension_numbers = #tpu.dot_dimension_numbers<[1], [0], [0], [1], [0, 0, 1, 1], [], []>} : vector<64x36xf32>, vector<36x8xf32>, vector<64x8xf32> -> vector<64x8xf32>
    %c0_32 = arith.constant 0 : index
    %c0_33 = arith.constant 0 : index
    %50 = vector.load %arg4[%c0_32, %c0_33] : memref<64x8xf32, #tpu.memory_space<vmem>>, vector<64x8xf32>
    tpu.vector_store %arg4[%c0_32, %c0_33], %49 {strides = array<i32>} : memref<64x8xf32, #tpu.memory_space<vmem>>, vector<64x8xf32>,
    %cst_34 = arith.constant dense<0.000000e+00> : vector<8xf32>
    %51 = vector.multi_reduction <add>, %49, %cst_34 [0] : vector<64x8xf32> to vector<8xf32>
    %52 = vector.shape_cast %51 : vector<8xf32> to vector<1x8xf32>
    %53 = arith.mulf %49, %49 : vector<64x8xf32>
    %cst_35 = arith.constant dense<0.000000e+00> : vector<8xf32>
    %54 = vector.multi_reduction <add>, %53, %cst_35 [0] : vector<64x8xf32> to vector<8xf32>
    %55 = vector.shape_cast %54 : vector<8xf32> to vector<1x8xf32>
    %56 = tpu.concatenate %52, %55 in 0 : vector<1x8xf32>, vector<1x8xf32> -> vector<2x8xf32>
    %c0_36 = arith.constant 0 : index
    %c0_37 = arith.constant 0 : index
    %c0_38 = arith.constant 0 : index
    %57 = vector.load %arg5[%c0_36, %c0_37, %c0_38] : memref<1x2x8xf32, #tpu.memory_space<vmem>>, vector<1x2x8xf32>
    %58 = vector.shape_cast %57 : vector<1x2x8xf32> to vector<2x8xf32>
    %59 = vector.shape_cast %56 : vector<2x8xf32> to vector<1x2x8xf32>
    tpu.vector_store %arg5[%c0_36, %c0_37, %c0_38], %59 {strides = array<i32>} : memref<1x2x8xf32, #tpu.memory_space<vmem>>, vector<1x2x8xf32>,
    return
  }
  func.func @transform_0(%arg0: i32, %arg1: i32) -> (i32, i32, i32, i32) {
    %c0_i32 = arith.constant 0 : i32
    %c0_i32_0 = arith.constant 0 : i32
    %c0_i32_1 = arith.constant 0 : i32
    %c0_i32_2 = arith.constant 0 : i32
    return %arg0, %c0_i32, %c0_i32_0, %c0_i32_1 : i32, i32, i32, i32
  }
  func.func @transform_1(%arg0: i32, %arg1: i32) -> (i32, i32) {
    %c0_i32 = arith.constant 0 : i32
    %c0_i32_0 = arith.constant 0 : i32
    %c0_i32_1 = arith.constant 0 : i32
    return %c0_i32, %c0_i32_0 : i32, i32
  }
  func.func @transform_2(%arg0: i32, %arg1: i32) -> (i32, i32) {
    %c1_i32 = arith.constant 1 : i32
    %0 = arith.muli %arg0, %c1_i32 : i32
    %1 = arith.addi %0, %arg1 : i32
    %c0_i32 = arith.constant 0 : i32
    %c0_i32_0 = arith.constant 0 : i32
    return %1, %c0_i32 : i32, i32
  }
  func.func @transform_3(%arg0: i32, %arg1: i32) -> (i32, i32, i32) {
    %c1_i32 = arith.constant 1 : i32
    %0 = arith.muli %arg0, %c1_i32 : i32
    %1 = arith.addi %0, %arg1 : i32
    %c0_i32 = arith.constant 0 : i32
    %c0_i32_0 = arith.constant 0 : i32
    %c0_i32_1 = arith.constant 0 : i32
    return %1, %c0_i32, %c0_i32_0 : i32, i32, i32
  }
}

module attributes {stable_mosaic.version = 11 : i64} {
  func.func @_conv3x3_kernel(%arg0: i32, %arg1: i32, %arg2: memref<4x9x9x4xf32, #tpu.memory_space<vmem>>, %arg3: memref<36x8xf32, #tpu.memory_space<vmem>>, %arg4: memref<64x8xf32, #tpu.memory_space<vmem>>, %arg5: memref<1x2x8xf32, #tpu.memory_space<vmem>>) attributes {dimension_semantics = [#tpu.dimension_semantics<parallel>, #tpu.dimension_semantics<parallel>], iteration_bounds = array<i64: 2, 1>, scalar_prefetch = 0 : i64, scratch_operands = 0 : i64, tpu.core_type = #tpu.core_type<tc>, window_params = [{transform_indices = @transform_0, window_bounds = array<i64: 4, 9, 9, 4>}, {pipeline_mode = #tpu.pipeline_mode<synchronous>, transform_indices = @transform_1, window_bounds = array<i64: 36, 8>}, {transform_indices = @transform_2, window_bounds = array<i64: 64, 8>}, {transform_indices = @transform_3, window_bounds = array<i64: 1, 2, 8>}]} {
    %c8_i32 = arith.constant 8 : i32
    %0 = arith.muli %arg1, %c8_i32 : i32
    %1 = tpu.assume_multiple %0, 8 : i32
    %c0_i32 = arith.constant 0 : i32
    %2 = arith.addi %1, %c0_i32 : i32
    %c0 = arith.constant 0 : index
    %3 = arith.index_cast %2 : i32 to index
    %c0_0 = arith.constant 0 : index
    %c0_1 = arith.constant 0 : index
    %4 = vector.load %arg2[%c0, %3, %c0_0, %c0_1] : memref<4x9x9x4xf32, #tpu.memory_space<vmem>>, vector<1x8x8x4xf32>
    %5 = vector.shape_cast %4 : vector<1x8x8x4xf32> to vector<8x8x4xf32>
    %6 = vector.shape_cast %5 : vector<8x8x4xf32> to vector<64x4xf32>
    %c0_i32_2 = arith.constant 0 : i32
    %7 = arith.addi %1, %c0_i32_2 : i32
    %c1 = arith.constant 1 : index
    %8 = arith.index_cast %7 : i32 to index
    %c0_3 = arith.constant 0 : index
    %c0_4 = arith.constant 0 : index
    %9 = vector.load %arg2[%c1, %8, %c0_3, %c0_4] : memref<4x9x9x4xf32, #tpu.memory_space<vmem>>, vector<1x8x8x4xf32>
    %10 = vector.shape_cast %9 : vector<1x8x8x4xf32> to vector<8x8x4xf32>
    %11 = vector.shape_cast %10 : vector<8x8x4xf32> to vector<64x4xf32>
    %c0_i32_5 = arith.constant 0 : i32
    %12 = arith.addi %1, %c0_i32_5 : i32
    %c0_6 = arith.constant 0 : index
    %13 = arith.index_cast %12 : i32 to index
    %c1_7 = arith.constant 1 : index
    %c0_8 = arith.constant 0 : index
    %14 = vector.load %arg2[%c0_6, %13, %c1_7, %c0_8] : memref<4x9x9x4xf32, #tpu.memory_space<vmem>>, vector<1x8x8x4xf32>
    %15 = vector.shape_cast %14 : vector<1x8x8x4xf32> to vector<8x8x4xf32>
    %16 = vector.shape_cast %15 : vector<8x8x4xf32> to vector<64x4xf32>
    %c0_i32_9 = arith.constant 0 : i32
    %17 = arith.addi %1, %c0_i32_9 : i32
    %c2 = arith.constant 2 : index
    %18 = arith.index_cast %17 : i32 to index
    %c0_10 = arith.constant 0 : index
    %c0_11 = arith.constant 0 : index
    %19 = vector.load %arg2[%c2, %18, %c0_10, %c0_11] : memref<4x9x9x4xf32, #tpu.memory_space<vmem>>, vector<1x8x8x4xf32>
    %20 = vector.shape_cast %19 : vector<1x8x8x4xf32> to vector<8x8x4xf32>
    %21 = vector.shape_cast %20 : vector<8x8x4xf32> to vector<64x4xf32>
    %c0_i32_12 = arith.constant 0 : i32
    %22 = arith.addi %1, %c0_i32_12 : i32
    %c3 = arith.constant 3 : index
    %23 = arith.index_cast %22 : i32 to index
    %c0_13 = arith.constant 0 : index
    %c0_14 = arith.constant 0 : index
    %24 = vector.load %arg2[%c3, %23, %c0_13, %c0_14] : memref<4x9x9x4xf32, #tpu.memory_space<vmem>>, vector<1x8x8x4xf32>
    %25 = vector.shape_cast %24 : vector<1x8x8x4xf32> to vector<8x8x4xf32>
    %26 = vector.shape_cast %25 : vector<8x8x4xf32> to vector<64x4xf32>
    %c0_i32_15 = arith.constant 0 : i32
    %27 = arith.addi %1, %c0_i32_15 : i32
    %c2_16 = arith.constant 2 : index
    %28 = arith.index_cast %27 : i32 to index
    %c1_17 = arith.constant 1 : index
    %c0_18 = arith.constant 0 : index
    %29 = vector.load %arg2[%c2_16, %28, %c1_17, %c0_18] : memref<4x9x9x4xf32, #tpu.memory_space<vmem>>, vector<1x8x8x4xf32>
    %30 = vector.shape_cast %29 : vector<1x8x8x4xf32> to vector<8x8x4xf32>
    %31 = vector.shape_cast %30 : vector<8x8x4xf32> to vector<64x4xf32>
    %c1_i32 = arith.constant 1 : i32
    %32 = arith.addi %1, %c1_i32 : i32
    %c0_19 = arith.constant 0 : index
    %33 = arith.index_cast %32 : i32 to index
    %c0_20 = arith.constant 0 : index
    %c0_21 = arith.constant 0 : index
    %34 = vector.load %arg2[%c0_19, %33, %c0_20, %c0_21] : memref<4x9x9x4xf32, #tpu.memory_space<vmem>>, vector<1x8x8x4xf32>
    %35 = vector.shape_cast %34 : vector<1x8x8x4xf32> to vector<8x8x4xf32>
    %36 = vector.shape_cast %35 : vector<8x8x4xf32> to vector<64x4xf32>
    %c1_i32_22 = arith.constant 1 : i32
    %37 = arith.addi %1, %c1_i32_22 : i32
    %c1_23 = arith.constant 1 : index
    %38 = arith.index_cast %37 : i32 to index
    %c0_24 = arith.constant 0 : index
    %c0_25 = arith.constant 0 : index
    %39 = vector.load %arg2[%c1_23, %38, %c0_24, %c0_25] : memref<4x9x9x4xf32, #tpu.memory_space<vmem>>, vector<1x8x8x4xf32>
    %40 = vector.shape_cast %39 : vector<1x8x8x4xf32> to vector<8x8x4xf32>
    %41 = vector.shape_cast %40 : vector<8x8x4xf32> to vector<64x4xf32>
    %c1_i32_26 = arith.constant 1 : i32
    %42 = arith.addi %1, %c1_i32_26 : i32
    %c0_27 = arith.constant 0 : index
    %43 = arith.index_cast %42 : i32 to index
    %c1_28 = arith.constant 1 : index
    %c0_29 = arith.constant 0 : index
    %44 = vector.load %arg2[%c0_27, %43, %c1_28, %c0_29] : memref<4x9x9x4xf32, #tpu.memory_space<vmem>>, vector<1x8x8x4xf32>
    %45 = vector.shape_cast %44 : vector<1x8x8x4xf32> to vector<8x8x4xf32>
    %46 = vector.shape_cast %45 : vector<8x8x4xf32> to vector<64x4xf32>
    %cst = arith.constant 0.000000e+00 : f32
    %47 = vector.broadcast %cst : f32 to vector<64x8xf32>
    %c0_30 = arith.constant 0 : index
    %c0_31 = arith.constant 0 : index
    %48 = vector.load %arg3[%c0_30, %c0_31] : memref<36x8xf32, #tpu.memory_space<vmem>>, vector<4x8xf32>
    %cst_32 = arith.constant dense<0.000000e+00> : vector<64x8xf32>
    %49 = tpu.matmul %6, %48, %cst_32 {dimension_numbers = #tpu.dot_dimension_numbers<[1], [0], [0], [1], [0, 0, 1, 1], [], []>} : vector<64x4xf32>, vector<4x8xf32>, vector<64x8xf32> -> vector<64x8xf32>
    %50 = arith.addf %47, %49 : vector<64x8xf32>
    %c4 = arith.constant 4 : index
    %c0_33 = arith.constant 0 : index
    %51 = vector.load %arg3[%c4, %c0_33] : memref<36x8xf32, #tpu.memory_space<vmem>>, vector<4x8xf32>
    %cst_34 = arith.constant dense<0.000000e+00> : vector<64x8xf32>
    %52 = tpu.matmul %11, %51, %cst_34 {dimension_numbers = #tpu.dot_dimension_numbers<[1], [0], [0], [1], [0, 0, 1, 1], [], []>} : vector<64x4xf32>, vector<4x8xf32>, vector<64x8xf32> -> vector<64x8xf32>
    %53 = arith.addf %50, %52 : vector<64x8xf32>
    %c8 = arith.constant 8 : index
    %c0_35 = arith.constant 0 : index
    %54 = vector.load %arg3[%c8, %c0_35] : memref<36x8xf32, #tpu.memory_space<vmem>>, vector<4x8xf32>
    %cst_36 = arith.constant dense<0.000000e+00> : vector<64x8xf32>
    %55 = tpu.matmul %16, %54, %cst_36 {dimension_numbers = #tpu.dot_dimension_numbers<[1], [0], [0], [1], [0, 0, 1, 1], [], []>} : vector<64x4xf32>, vector<4x8xf32>, vector<64x8xf32> -> vector<64x8xf32>
    %56 = arith.addf %53, %55 : vector<64x8xf32>
    %c12 = arith.constant 12 : index
    %c0_37 = arith.constant 0 : index
    %57 = vector.load %arg3[%c12, %c0_37] : memref<36x8xf32, #tpu.memory_space<vmem>>, vector<4x8xf32>
    %cst_38 = arith.constant dense<0.000000e+00> : vector<64x8xf32>
    %58 = tpu.matmul %21, %57, %cst_38 {dimension_numbers = #tpu.dot_dimension_numbers<[1], [0], [0], [1], [0, 0, 1, 1], [], []>} : vector<64x4xf32>, vector<4x8xf32>, vector<64x8xf32> -> vector<64x8xf32>
    %59 = arith.addf %56, %58 : vector<64x8xf32>
    %c16 = arith.constant 16 : index
    %c0_39 = arith.constant 0 : index
    %60 = vector.load %arg3[%c16, %c0_39] : memref<36x8xf32, #tpu.memory_space<vmem>>, vector<4x8xf32>
    %cst_40 = arith.constant dense<0.000000e+00> : vector<64x8xf32>
    %61 = tpu.matmul %26, %60, %cst_40 {dimension_numbers = #tpu.dot_dimension_numbers<[1], [0], [0], [1], [0, 0, 1, 1], [], []>} : vector<64x4xf32>, vector<4x8xf32>, vector<64x8xf32> -> vector<64x8xf32>
    %62 = arith.addf %59, %61 : vector<64x8xf32>
    %c20 = arith.constant 20 : index
    %c0_41 = arith.constant 0 : index
    %63 = vector.load %arg3[%c20, %c0_41] : memref<36x8xf32, #tpu.memory_space<vmem>>, vector<4x8xf32>
    %cst_42 = arith.constant dense<0.000000e+00> : vector<64x8xf32>
    %64 = tpu.matmul %31, %63, %cst_42 {dimension_numbers = #tpu.dot_dimension_numbers<[1], [0], [0], [1], [0, 0, 1, 1], [], []>} : vector<64x4xf32>, vector<4x8xf32>, vector<64x8xf32> -> vector<64x8xf32>
    %65 = arith.addf %62, %64 : vector<64x8xf32>
    %c24 = arith.constant 24 : index
    %c0_43 = arith.constant 0 : index
    %66 = vector.load %arg3[%c24, %c0_43] : memref<36x8xf32, #tpu.memory_space<vmem>>, vector<4x8xf32>
    %cst_44 = arith.constant dense<0.000000e+00> : vector<64x8xf32>
    %67 = tpu.matmul %36, %66, %cst_44 {dimension_numbers = #tpu.dot_dimension_numbers<[1], [0], [0], [1], [0, 0, 1, 1], [], []>} : vector<64x4xf32>, vector<4x8xf32>, vector<64x8xf32> -> vector<64x8xf32>
    %68 = arith.addf %65, %67 : vector<64x8xf32>
    %c28 = arith.constant 28 : index
    %c0_45 = arith.constant 0 : index
    %69 = vector.load %arg3[%c28, %c0_45] : memref<36x8xf32, #tpu.memory_space<vmem>>, vector<4x8xf32>
    %cst_46 = arith.constant dense<0.000000e+00> : vector<64x8xf32>
    %70 = tpu.matmul %41, %69, %cst_46 {dimension_numbers = #tpu.dot_dimension_numbers<[1], [0], [0], [1], [0, 0, 1, 1], [], []>} : vector<64x4xf32>, vector<4x8xf32>, vector<64x8xf32> -> vector<64x8xf32>
    %71 = arith.addf %68, %70 : vector<64x8xf32>
    %c32 = arith.constant 32 : index
    %c0_47 = arith.constant 0 : index
    %72 = vector.load %arg3[%c32, %c0_47] : memref<36x8xf32, #tpu.memory_space<vmem>>, vector<4x8xf32>
    %cst_48 = arith.constant dense<0.000000e+00> : vector<64x8xf32>
    %73 = tpu.matmul %46, %72, %cst_48 {dimension_numbers = #tpu.dot_dimension_numbers<[1], [0], [0], [1], [0, 0, 1, 1], [], []>} : vector<64x4xf32>, vector<4x8xf32>, vector<64x8xf32> -> vector<64x8xf32>
    %74 = arith.addf %71, %73 : vector<64x8xf32>
    %c0_49 = arith.constant 0 : index
    %c0_50 = arith.constant 0 : index
    %75 = vector.load %arg4[%c0_49, %c0_50] : memref<64x8xf32, #tpu.memory_space<vmem>>, vector<64x8xf32>
    tpu.vector_store %arg4[%c0_49, %c0_50], %74 {strides = array<i32>} : memref<64x8xf32, #tpu.memory_space<vmem>>, vector<64x8xf32>,
    %cst_51 = arith.constant dense<0.000000e+00> : vector<8xf32>
    %76 = vector.multi_reduction <add>, %74, %cst_51 [0] : vector<64x8xf32> to vector<8xf32>
    %77 = vector.shape_cast %76 : vector<8xf32> to vector<1x8xf32>
    %78 = arith.mulf %74, %74 : vector<64x8xf32>
    %cst_52 = arith.constant dense<0.000000e+00> : vector<8xf32>
    %79 = vector.multi_reduction <add>, %78, %cst_52 [0] : vector<64x8xf32> to vector<8xf32>
    %80 = vector.shape_cast %79 : vector<8xf32> to vector<1x8xf32>
    %81 = tpu.concatenate %77, %80 in 0 : vector<1x8xf32>, vector<1x8xf32> -> vector<2x8xf32>
    %c0_53 = arith.constant 0 : index
    %c0_54 = arith.constant 0 : index
    %c0_55 = arith.constant 0 : index
    %82 = vector.load %arg5[%c0_53, %c0_54, %c0_55] : memref<1x2x8xf32, #tpu.memory_space<vmem>>, vector<1x2x8xf32>
    %83 = vector.shape_cast %82 : vector<1x2x8xf32> to vector<2x8xf32>
    %84 = vector.shape_cast %81 : vector<2x8xf32> to vector<1x2x8xf32>
    tpu.vector_store %arg5[%c0_53, %c0_54, %c0_55], %84 {strides = array<i32>} : memref<1x2x8xf32, #tpu.memory_space<vmem>>, vector<1x2x8xf32>,
    return
  }
  func.func @transform_0(%arg0: i32, %arg1: i32) -> (i32, i32, i32, i32) {
    %c0_i32 = arith.constant 0 : i32
    %c0_i32_0 = arith.constant 0 : i32
    %c0_i32_1 = arith.constant 0 : i32
    %c0_i32_2 = arith.constant 0 : i32
    return %arg0, %c0_i32, %c0_i32_0, %c0_i32_1 : i32, i32, i32, i32
  }
  func.func @transform_1(%arg0: i32, %arg1: i32) -> (i32, i32) {
    %c0_i32 = arith.constant 0 : i32
    %c0_i32_0 = arith.constant 0 : i32
    %c0_i32_1 = arith.constant 0 : i32
    return %c0_i32, %c0_i32_0 : i32, i32
  }
  func.func @transform_2(%arg0: i32, %arg1: i32) -> (i32, i32) {
    %c1_i32 = arith.constant 1 : i32
    %0 = arith.muli %arg0, %c1_i32 : i32
    %1 = arith.addi %0, %arg1 : i32
    %c0_i32 = arith.constant 0 : i32
    %c0_i32_0 = arith.constant 0 : i32
    return %1, %c0_i32 : i32, i32
  }
  func.func @transform_3(%arg0: i32, %arg1: i32) -> (i32, i32, i32) {
    %c1_i32 = arith.constant 1 : i32
    %0 = arith.muli %arg0, %c1_i32 : i32
    %1 = arith.addi %0, %arg1 : i32
    %c0_i32 = arith.constant 0 : i32
    %c0_i32_0 = arith.constant 0 : i32
    %c0_i32_1 = arith.constant 0 : i32
    return %1, %c0_i32, %c0_i32_0 : i32, i32, i32
  }
}

</mosaic_0001>

<llo_original>
// kernel: tpu_custom_call.1
$region0: #{tpu_custom_call.1}
  #allocation0 [shape = 'u32[]', space=smem, size = 0x4, offset = 0x4, fixed_abs, tag = 'smem constant byte address 0x4 - core index']
  #allocation1 [shape = 'u32[144,128]{1,0:T(1,128)}', space=vmem, size = 0x12000, scoped, tag = 'internal scratch']
  %s0 = inlined_call_operand.vmem [shape: f32[8,9,9,4], index: 0, kind: input, shape index: {}]
  %s1 = inlined_call_operand.vmem [shape: f32[36,8], index: 1, kind: input, shape index: {}]
  %s2 = inlined_call_operand.vmem [shape: f32[128,8], index: 2, kind: output, shape index: {0}]
  %s3 = inlined_call_operand.hbm [shape: f32[2,2,8], index: 3, kind: output, shape index: {1}]
  %4 = xla_tuple %s2, %s3
  %s5 = sld [smem:[#allocation0]]
  $region49: #{tpu_custom_call.1} parent=0
    _
  %s7 = ssub.s32 1, %s5
  %s8 = scalar_select 0, %s7, %s5
  $region1: #{tpu_custom_call.1} parent=0
    #allocation2 [shape = 'u8[2048]{0}', space=vmem, size = 0x800, scoped, tag = 'output window, operand 1']
    #allocation3 [shape = 's32[2]{0}', space=sflag, size = 0x8, scoped, tag = 'scoped memory for tpu_custom_call.1']
    %9 = vsyncpa [#allocation3], 0
    %s10 = scalar_lea.sflag [#allocation3], 1
    %11 = vsyncpa %s10, 0
    loop: start=0, step=1, limit=4
    $region2: #{tpu_custom_call.1} parent=1 // loop_pre_header
      _
    $region3: #{tpu_custom_call.1} parent=1 // loop_header
      %s13 = sphi 0, %s17
      %p14 = scmp.ge.s32.totalorder %s13, 4
      %s20 = sphi 0, %s32
      %s21 = sphi 0, %s28
      %s22 = sphi 0, %s20
      %s23 = sphi 0, %s21
      %s24 = sphi 0, %s22
      %s25 = sphi 0, %s23
      %s35 = sphi 0, %s37
      %s38 = sphi 0, %s35
      %s39 = sphi 0, %s38
      %s55 = sphi 0, %s39
      %s59 = sphi 0, %s59
      %s61 = sphi 0, %s59
      %s62 = sphi 0, %s61
      %s76 = sphi 0, %s62
      %s84 = sphi 0, %s86
      %s87 = sphi 0, %s84
      %s88 = sphi 0, %s87
      %s104 = sphi 0, %s88
      %s112 = sphi 0, %s114
      %s115 = sphi 0, %s112
      %s116 = sphi 0, %s115
      %s132 = sphi 0, %s116
    $region4: #{tpu_custom_call.1} parent=1 // loop_header_branch
      %16 = sbr.rel (%p14) target = $region8
    $region5: #{tpu_custom_call.1} parent=1 // loop_body
      %s18 = ssub.s32 %s13, 1
      %s19 = ssub.s32 %s13, 2
      %s26 = sadd.s32 1, %s21
      %p27 = scmp.ge.s32.totalorder %s26, 1
      %s28 = scalar_select %p27, 0, %s26
      %s29 = sadd.s32 1, %s20
      %s30 = scalar_select %p27, %s29, %s20
      %p31 = scmp.ge.s32.totalorder %s30, 2
      %s32 = scalar_select %p31, 0, %s30
      %s33 = ssub.s32 %s20, %s32
      %p34 = scmp.eq.s32.totalorder %s33, 0
      %s36 = sadd.s32 %s35, 1
      %s37 = scalar_select %p34, %s35, %s36
      %p40 = pneg %p34
      %p41 = scmp.eq.s32.totalorder %s13, 1
      %p42 = por %p40, %p41
      %p43 = scmp.ne.s32.totalorder %s35, %s38
      %p44 = scmp.eq.s32.totalorder %s13, 0
      %p45 = por %p43, %p44
      %p46 = scmp.ne.s32.totalorder %s35, %s38
      %p47 = scmp.eq.s32.totalorder %s18, 1
      %p48 = por %p46, %p47
      %p49 = scmp.ne.s32.totalorder %s38, %s39
      %p50 = scmp.eq.s32.totalorder %s18, 0
      %p51 = por %p49, %p50
      %p52 = scmp.ne.s32.totalorder %s38, %s39
      %p53 = scmp.eq.s32.totalorder %s19, 1
      %p54 = por %p52, %p53
      %p56 = scmp.ne.s32.totalorder %s39, %s55
      %p57 = scmp.eq.s32.totalorder %s19, 0
      %p58 = por %p56, %p57
      %s60 = sadd.s32 %s59, 1
      %p63 = scmp.eq.s32.totalorder %s13, 1
      %p64 = scmp.ne.s32.totalorder %s59, %s61
      %p65 = scmp.eq.s32.totalorder %s13, 0
      %p66 = por %p64, %p65
      %p67 = scmp.ne.s32.totalorder %s59, %s61
      %p68 = scmp.eq.s32.totalorder %s18, 1
      %p69 = por %p67, %p68
      %p70 = scmp.ne.s32.totalorder %s61, %s62
      %p71 = scmp.eq.s32.totalorder %s18, 0
      %p72 = por %p70, %p71
      %p73 = scmp.ne.s32.totalorder %s61, %s62
      %p74 = scmp.eq.s32.totalorder %s19, 1
      %p75 = por %p73, %p74
      %p77 = scmp.ne.s32.totalorder %s62, %s76
      %p78 = scmp.eq.s32.totalorder %s19, 0
      %p79 = por %p77, %p78
      %s80 = sadd.s32 %s20, %s21
      %s81 = sadd.s32 %s32, %s28
      %s82 = ssub.s32 %s80, %s81
      %p83 = scmp.eq.s32.totalorder %s82, 0
      %s85 = sadd.s32 %s84, 1
      %s86 = scalar_select %p83, %s84, %s85
      %p89 = pneg %p83
      %p90 = scmp.eq.s32.totalorder %s13, 1
      %p91 = por %p89, %p90
      %p92 = scmp.ne.s32.totalorder %s84, %s87
      %p93 = scmp.eq.s32.totalorder %s13, 0
      %p94 = por %p92, %p93
      %p95 = scmp.ne.s32.totalorder %s84, %s87
      %p96 = scmp.eq.s32.totalorder %s18, 1
      %p97 = por %p95, %p96
      %p98 = scmp.ne.s32.totalorder %s87, %s88
      %p99 = scmp.eq.s32.totalorder %s18, 0
      %p100 = por %p98, %p99
      %p101 = scmp.ne.s32.totalorder %s87, %s88
      %p102 = scmp.eq.s32.totalorder %s19, 1
      %p103 = por %p101, %p102
      %p105 = scmp.ne.s32.totalorder %s88, %s104
      %p106 = scmp.eq.s32.totalorder %s19, 0
      %p107 = por %p105, %p106
      %s108 = sadd.s32 %s20, %s21
      %s109 = sadd.s32 %s32, %s28
      %s110 = ssub.s32 %s108, %s109
      %p111 = scmp.eq.s32.totalorder %s110, 0
      %s113 = sadd.s32 %s112, 1
      %s114 = scalar_select %p111, %s112, %s113
      %p117 = pneg %p111
      %p118 = scmp.eq.s32.totalorder %s13, 1
      %p119 = por %p117, %p118
      %p120 = scmp.ne.s32.totalorder %s112, %s115
      %p121 = scmp.eq.s32.totalorder %s13, 0
      %p122 = por %p120, %p121
      %p123 = scmp.ne.s32.totalorder %s112, %s115
      %p124 = scmp.eq.s32.totalorder %s18, 1
      %p125 = por %p123, %p124
      %p126 = scmp.ne.s32.totalorder %s115, %s116
      %p127 = scmp.eq.s32.totalorder %s18, 0
      %p128 = por %p126, %p127
      %p129 = scmp.ne.s32.totalorder %s115, %s116
      %p130 = scmp.eq.s32.totalorder %s19, 1
      %p131 = por %p129, %p130
      %p133 = scmp.ne.s32.totalorder %s116, %s132
      %p134 = scmp.eq.s32.totalorder %s19, 0
      %p135 = por %p133, %p134
      %p136 = scmp.le.s32.totalorder 1, %s13
      %p137 = scmp.lt.s32.totalorder %s13, 3
      %p138 = pnand %p136, %p137
      %p139 = pneg %p138
      // Predicated region
      $region9: #{tpu_custom_call.1} parent=5 // pred_check
        _
      $region10: #{tpu_custom_call.1} parent=5 // pred_check_branch
        %141 = sbr.rel (%p138) target = $region12
      $region11: #{tpu_custom_call.1} parent=5 // pred_region
        %s142 = ssub.s32 %s13, 1
        // Predicated region
        $region13: #{tpu_custom_call.1} parent=11 // pred_check
          %p143 = pneg %p72
        $region14: #{tpu_custom_call.1} parent=11 // pred_check_branch
          %145 = sbr.rel (%p143) target = $region16
        $region15: #{tpu_custom_call.1} parent=11 // pred_region
          _
        $region16: #{tpu_custom_call.1} parent=11 // pred_fallthru
          _
      $region12: #{tpu_custom_call.1} parent=5 // pred_fallthru
        _
      %p146 = scmp.lt.s32.totalorder %s13, 2
      // Predicated region
      $region17: #{tpu_custom_call.1} parent=5 // pred_check
        %p147 = pneg %p146
      $region18: #{tpu_custom_call.1} parent=5 // pred_check_branch
        %149 = sbr.rel (%p147) target = $region20
      $region19: #{tpu_custom_call.1} parent=5 // pred_region
        // Predicated region
        $region21: #{tpu_custom_call.1} parent=19 // pred_check
          %p150 = pneg %p45
        $region22: #{tpu_custom_call.1} parent=19 // pred_check_branch
          %152 = sbr.rel (%p150) target = $region24
        $region23: #{tpu_custom_call.1} parent=19 // pred_region
          %s153 = smul.u32 4, %s20
          %p154 = scmp.lt.s32.totalorder %s153, 7
          %s155 = scalar_select %p154, %s153, 7
          %s156 = smul.addr %s155, 18
          %s157 = smul.addr %s156, 8
          %s158 = scalar_lea.vmem %s0, %s157
          %s159 = smul.u32 4, %s20
        $region24: #{tpu_custom_call.1} parent=19 // pred_fallthru
          _
      $region20: #{tpu_custom_call.1} parent=5 // pred_fallthru
        _
      %p160 = scmp.le.s32.totalorder 1, %s13
      %p161 = scmp.lt.s32.totalorder %s13, 3
      %p162 = pnand %p160, %p161
      %p163 = pneg %p162
      // Predicated region
      $region25: #{tpu_custom_call.1} parent=5 // pred_check
        _
      $region26: #{tpu_custom_call.1} parent=5 // pred_check_branch
        %165 = sbr.rel (%p162) target = $region28
      $region27: #{tpu_custom_call.1} parent=5 // pred_region
        %s166 = ssub.s32 %s13, 1
        %s167 = smul.u32 4, %s22
        %p168 = scmp.lt.s32.totalorder %s167, 7
        %s169 = scalar_select %p168, %s167, 7
        %s170 = smul.addr %s169, 18
        %s171 = smul.addr %s170, 8
        %s172 = scalar_lea.vmem %s0, %s171
        %p173 = pneg %p51
        %p174 = pneg %p48
        %p175 = pneg %p72
        %p176 = pneg %p69
        %p177 = pneg %p100
        %p178 = pneg %p97
        %s179 = sadd.s32 %s22, %s23
        %s180 = smul.u32 8, %s179
        %p181 = scmp.lt.s32.totalorder %s180, 15
        %s182 = scalar_select %p181, %s180, 15
        %s183 = smul.addr %s182, 8
        %s184 = scalar_lea.vmem %s2, %s183
        %p185 = pneg %p128
        %p186 = pneg %p125
        %s187 = sand.u32 %s115, 1
        %s188 = scalar_lea.sflag [#allocation3], %s187
        %s189 = sand.u32 %s115, 1
        %s190 = smul.addr %s189, 2
        %s191 = scalar_lea.vmem [#allocation2], %s190
        %s192 = smul.u32 4, %s22
        %p193 = scmp.lt.s32.totalorder %s192, 7
        %s194 = scalar_select %p193, %s192, 7
        %s195 = smul.addr %s194, 18
        %s196 = smul.addr %s195, 8
        %s197 = scalar_lea.vmem %s0, %s196
        %s198 = smul.u32 4, %s22
        %s199 = sadd.s32 %s22, %s23
        %s200 = smul.u32 8, %s199
        %p201 = scmp.lt.s32.totalorder %s200, 15
        %s202 = scalar_select %p201, %s200, 15
        %s203 = smul.addr %s202, 8
        %s204 = scalar_lea.vmem %s2, %s203
        %s205 = sadd.s32 %s22, %s23
        %s206 = smul.u32 8, %s205
        %s207 = sadd.s32 %s22, %s23
        %s208 = smul.u32 %s23, 8
        %s209 = smul.u32 %s208, 16
        %s210 = scalar_lea.vmem %s197, %s209
        %v211 = vld [vmem:[%s210] sm:$0xff]
        %v212 = vld [vmem:[%s210 + $0x10] sm:$0xff]
        %v213 = vld [vmem:[%s210 + $0x20] sm:$0xff]
        %v214 = vld [vmem:[%s210 + $0x30] sm:$0xff]
        %v215 = vld [vmem:[%s210 + $0x40] sm:$0xff]
        %v216 = vld [vmem:[%s210 + $0x50] sm:$0xff]
        %v217 = vld [vmem:[%s210 + $0x60] sm:$0xff]
        %v218 = vld [vmem:[%s210 + $0x70] sm:$0xff]
        %s219 = sadd.s32 %s209, 144
        %s220 = scalar_lea.vmem %s197, %s219
        %v221 = vld [vmem:[%s220] sm:$0xff]
        %v222 = vld [vmem:[%s220 + $0x10] sm:$0xff]
        %v223 = vld [vmem:[%s220 + $0x20] sm:$0xff]
        %v224 = vld [vmem:[%s220 + $0x30] sm:$0xff]
        %v225 = vld [vmem:[%s220 + $0x40] sm:$0xff]
        %v226 = vld [vmem:[%s220 + $0x50] sm:$0xff]
        %v227 = vld [vmem:[%s220 + $0x60] sm:$0xff]
        %v228 = vld [vmem:[%s220 + $0x70] sm:$0xff]
        %v229 = vld [vmem:[%s210 + $0x1] sm:$0xff]
        %v230 = vld [vmem:[%s210 + $0x11] sm:$0xff]
        %v231 = vld [vmem:[%s210 + $0x21] sm:$0xff]
        %v232 = vld [vmem:[%s210 + $0x31] sm:$0xff]
        %v233 = vld [vmem:[%s210 + $0x41] sm:$0xff]
        %v234 = vld [vmem:[%s210 + $0x51] sm:$0xff]
        %v235 = vld [vmem:[%s210 + $0x61] sm:$0xff]
        %v236 = vld [vmem:[%s210 + $0x71] sm:$0xff]
        %s237 = sadd.s32 %s209, 288
        %s238 = scalar_lea.vmem %s197, %s237
        %v239 = vld [vmem:[%s238] sm:$0xff]
        %v240 = vld [vmem:[%s238 + $0x10] sm:$0xff]
        %v241 = vld [vmem:[%s238 + $0x20] sm:$0xff]
        %v242 = vld [vmem:[%s238 + $0x30] sm:$0xff]
        %v243 = vld [vmem:[%s238 + $0x40] sm:$0xff]
        %v244 = vld [vmem:[%s238 + $0x50] sm:$0xff]
        %v245 = vld [vmem:[%s238 + $0x60] sm:$0xff]
        %v246 = vld [vmem:[%s238 + $0x70] sm:$0xff]
        %s247 = sadd.s32 %s209, 432
        %s248 = scalar_lea.vmem %s197, %s247
        %v249 = vld [vmem:[%s248] sm:$0xff]
        %v250 = vld [vmem:[%s248 + $0x10] sm:$0xff]
        %v251 = vld [vmem:[%s248 + $0x20] sm:$0xff]
        %v252 = vld [vmem:[%s248 + $0x30] sm:$0xff]
        %v253 = vld [vmem:[%s248 + $0x40] sm:$0xff]
        %v254 = vld [vmem:[%s248 + $0x50] sm:$0xff]
        %v255 = vld [vmem:[%s248 + $0x60] sm:$0xff]
        %v256 = vld [vmem:[%s248 + $0x70] sm:$0xff]
        %v257 = vld [vmem:[%s238 + $0x1] sm:$0xff]
        %v258 = vld [vmem:[%s238 + $0x11] sm:$0xff]
        %v259 = vld [vmem:[%s238 + $0x21] sm:$0xff]
        %v260 = vld [vmem:[%s238 + $0x31] sm:$0xff]
        %v261 = vld [vmem:[%s238 + $0x41] sm:$0xff]
        %v262 = vld [vmem:[%s238 + $0x51] sm:$0xff]
        %v263 = vld [vmem:[%s238 + $0x61] sm:$0xff]
        %v264 = vld [vmem:[%s238 + $0x71] sm:$0xff]
        %s265 = sadd.s32 %s208, 1
        %s266 = smul.u32 %s265, 16
        %s267 = scalar_lea.vmem %s197, %s266
        %v268 = vld [vmem:[%s267] sm:$0xff]
        %v269 = vld [vmem:[%s267 + $0x10] sm:$0xff]
        %v270 = vld [vmem:[%s267 + $0x20] sm:$0xff]
        %v271 = vld [vmem:[%s267 + $0x30] sm:$0xff]
        %v272 = vld [vmem:[%s267 + $0x40] sm:$0xff]
        %v273 = vld [vmem:[%s267 + $0x50] sm:$0xff]
        %v274 = vld [vmem:[%s267 + $0x60] sm:$0xff]
        %v275 = vld [vmem:[%s267 + $0x70] sm:$0xff]
        %s276 = sadd.s32 %s266, 144
        %s277 = scalar_lea.vmem %s197, %s276
        %v278 = vld [vmem:[%s277] sm:$0xff]
        %v279 = vld [vmem:[%s277 + $0x10] sm:$0xff]
        %v280 = vld [vmem:[%s277 + $0x20] sm:$0xff]
        %v281 = vld [vmem:[%s277 + $0x30] sm:$0xff]
        %v282 = vld [vmem:[%s277 + $0x40] sm:$0xff]
        %v283 = vld [vmem:[%s277 + $0x50] sm:$0xff]
        %v284 = vld [vmem:[%s277 + $0x60] sm:$0xff]
        %v285 = vld [vmem:[%s277 + $0x70] sm:$0xff]
        %v286 = vld [vmem:[%s267 + $0x1] sm:$0xff]
        %v287 = vld [vmem:[%s267 + $0x11] sm:$0xff]
        %v288 = vld [vmem:[%s267 + $0x21] sm:$0xff]
        %v289 = vld [vmem:[%s267 + $0x31] sm:$0xff]
        %v290 = vld [vmem:[%s267 + $0x41] sm:$0xff]
        %v291 = vld [vmem:[%s267 + $0x51] sm:$0xff]
        %v292 = vld [vmem:[%s267 + $0x61] sm:$0xff]
        %v293 = vld [vmem:[%s267 + $0x71] sm:$0xff]
        %302 = vrot.lane.b32.xlu0 %v221, 4
        %v303 = vpop.permute.xlu0 %302
        %304 = vrot.lane.b32.xlu0 %v222, 4
        %v305 = vpop.permute.xlu0 %304
        %306 = vrot.lane.b32.xlu0 %v223, 4
        %v307 = vpop.permute.xlu0 %306
        %308 = vrot.lane.b32.xlu0 %v224, 4
        %v309 = vpop.permute.xlu0 %308
        %310 = vrot.lane.b32.xlu0 %v225, 4
        %v311 = vpop.permute.xlu0 %310
        %312 = vrot.lane.b32.xlu0 %v226, 4
        %v313 = vpop.permute.xlu0 %312
        %314 = vrot.lane.b32.xlu0 %v227, 4
        %v315 = vpop.permute.xlu0 %314
        %316 = vrot.lane.b32.xlu0 %v228, 4
        %v317 = vpop.permute.xlu0 %316
        %334 = vrot.lane.b32.xlu0 %v229, 8
        %v335 = vpop.permute.xlu0 %334
        %336 = vrot.lane.b32.xlu0 %v230, 8
        %v337 = vpop.permute.xlu0 %336
        %338 = vrot.lane.b32.xlu0 %v231, 8
        %v339 = vpop.permute.xlu0 %338
        %340 = vrot.lane.b32.xlu0 %v232, 8
        %v341 = vpop.permute.xlu0 %340
        %342 = vrot.lane.b32.xlu0 %v233, 8
        %v343 = vpop.permute.xlu0 %342
        %344 = vrot.lane.b32.xlu0 %v234, 8
        %v345 = vpop.permute.xlu0 %344
        %346 = vrot.lane.b32.xlu0 %v235, 8
        %v347 = vpop.permute.xlu0 %346
        %348 = vrot.lane.b32.xlu0 %v236, 8
        %v349 = vpop.permute.xlu0 %348
        %366 = vrot.lane.b32.xlu0 %v239, 12
        %v367 = vpop.permute.xlu0 %366
        %368 = vrot.lane.b32.xlu0 %v240, 12
        %v369 = vpop.permute.xlu0 %368
        %370 = vrot.lane.b32.xlu0 %v241, 12
        %v371 = vpop.permute.xlu0 %370
        %372 = vrot.lane.b32.xlu0 %v242, 12
        %v373 = vpop.permute.xlu0 %372
        %374 = vrot.lane.b32.xlu0 %v243, 12
        %v375 = vpop.permute.xlu0 %374
        %376 = vrot.lane.b32.xlu0 %v244, 12
        %v377 = vpop.permute.xlu0 %376
        %378 = vrot.lane.b32.xlu0 %v245, 12
        %v379 = vpop.permute.xlu0 %378
        %380 = vrot.lane.b32.xlu0 %v246, 12
        %v381 = vpop.permute.xlu0 %380
        %398 = vrot.lane.b32.xlu0 %v249, 16
        %v399 = vpop.permute.xlu0 %398
        %400 = vrot.lane.b32.xlu0 %v250, 16
        %v401 = vpop.permute.xlu0 %400
        %402 = vrot.lane.b32.xlu0 %v251, 16
        %v403 = vpop.permute.xlu0 %402
        %404 = vrot.lane.b32.xlu0 %v252, 16
        %v405 = vpop.permute.xlu0 %404
        %406 = vrot.lane.b32.xlu0 %v253, 16
        %v407 = vpop.permute.xlu0 %406
        %408 = vrot.lane.b32.xlu0 %v254, 16
        %v409 = vpop.permute.xlu0 %408
        %410 = vrot.lane.b32.xlu0 %v255, 16
        %v411 = vpop.permute.xlu0 %410
        %412 = vrot.lane.b32.xlu0 %v256, 16
        %v413 = vpop.permute.xlu0 %412
        %430 = vrot.lane.b32.xlu0 %v257, 20
        %v431 = vpop.permute.xlu0 %430
        %432 = vrot.lane.b32.xlu0 %v258, 20
        %v433 = vpop.permute.xlu0 %432
        %434 = vrot.lane.b32.xlu0 %v259, 20
        %v435 = vpop.permute.xlu0 %434
        %436 = vrot.lane.b32.xlu0 %v260, 20
        %v437 = vpop.permute.xlu0 %436
        %438 = vrot.lane.b32.xlu0 %v261, 20
        %v439 = vpop.permute.xlu0 %438
        %440 = vrot.lane.b32.xlu0 %v262, 20
        %v441 = vpop.permute.xlu0 %440
        %442 = vrot.lane.b32.xlu0 %v263, 20
        %v443 = vpop.permute.xlu0 %442
        %444 = vrot.lane.b32.xlu0 %v264, 20
        %v445 = vpop.permute.xlu0 %444
        %462 = vrot.lane.b32.xlu0 %v268, 24
        %v463 = vpop.permute.xlu0 %462
        %464 = vrot.lane.b32.xlu0 %v269, 24
        %v465 = vpop.permute.xlu0 %464
        %466 = vrot.lane.b32.xlu0 %v270, 24
        %v467 = vpop.permute.xlu0 %466
        %468 = vrot.lane.b32.xlu0 %v271, 24
        %v469 = vpop.permute.xlu0 %468
        %470 = vrot.lane.b32.xlu0 %v272, 24
        %v471 = vpop.permute.xlu0 %470
        %472 = vrot.lane.b32.xlu0 %v273, 24
        %v473 = vpop.permute.xlu0 %472
        %474 = vrot.lane.b32.xlu0 %v274, 24
        %v475 = vpop.permute.xlu0 %474
        %476 = vrot.lane.b32.xlu0 %v275, 24
        %v477 = vpop.permute.xlu0 %476
        %494 = vrot.lane.b32.xlu0 %v278, 28
        %v495 = vpop.permute.xlu0 %494
        %496 = vrot.lane.b32.xlu0 %v279, 28
        %v497 = vpop.permute.xlu0 %496
        %498 = vrot.lane.b32.xlu0 %v280, 28
        %v499 = vpop.permute.xlu0 %498
        %500 = vrot.lane.b32.xlu0 %v281, 28
        %v501 = vpop.permute.xlu0 %500
        %502 = vrot.lane.b32.xlu0 %v282, 28
        %v503 = vpop.permute.xlu0 %502
        %504 = vrot.lane.b32.xlu0 %v283, 28
        %v505 = vpop.permute.xlu0 %504
        %506 = vrot.lane.b32.xlu0 %v284, 28
        %v507 = vpop.permute.xlu0 %506
        %508 = vrot.lane.b32.xlu0 %v285, 28
        %v509 = vpop.permute.xlu0 %508
        %526 = vrot.lane.b32.xlu0 %v286, 32
        %v527 = vpop.permute.xlu0 %526
        %528 = vrot.lane.b32.xlu0 %v287, 32
        %v529 = vpop.permute.xlu0 %528
        %530 = vrot.lane.b32.xlu0 %v288, 32
        %v531 = vpop.permute.xlu0 %530
        %532 = vrot.lane.b32.xlu0 %v289, 32
        %v533 = vpop.permute.xlu0 %532
        %534 = vrot.lane.b32.xlu0 %v290, 32
        %v535 = vpop.permute.xlu0 %534
        %536 = vrot.lane.b32.xlu0 %v291, 32
        %v537 = vpop.permute.xlu0 %536
        %538 = vrot.lane.b32.xlu0 %v292, 32
        %v539 = vpop.permute.xlu0 %538
        %540 = vrot.lane.b32.xlu0 %v293, 32
        %v541 = vpop.permute.xlu0 %540
        %vm550 = vcmask 31744
        %v551 = vsel %vm550, %v211, %v303
        %v552 = vsel %vm550, %v212, %v305
        %v553 = vsel %vm550, %v213, %v307
        %v554 = vsel %vm550, %v214, %v309
        %v555 = vsel %vm550, %v215, %v311
        %v556 = vsel %vm550, %v216, %v313
        %v557 = vsel %vm550, %v217, %v315
        %v558 = vsel %vm550, %v218, %v317
        %vm559 = vcmask 64512
        %v560 = vsel %vm559, %v551, %v335
        %v561 = vsel %vm559, %v552, %v337
        %v562 = vsel %vm559, %v553, %v339
        %v563 = vsel %vm559, %v554, %v341
        %v564 = vsel %vm559, %v555, %v343
        %v565 = vsel %vm559, %v556, %v345
        %v566 = vsel %vm559, %v557, %v347
        %v567 = vsel %vm559, %v558, %v349
        %vm568 = vcmask 97280
        %v569 = vsel %vm568, %v560, %v367
        %v570 = vsel %vm568, %v561, %v369
        %v571 = vsel %vm568, %v562, %v371
        %v572 = vsel %vm568, %v563, %v373
        %v573 = vsel %vm568, %v564, %v375
        %v574 = vsel %vm568, %v565, %v377
        %v575 = vsel %vm568, %v566, %v379
        %v576 = vsel %vm568, %v567, %v381
        %vm577 = vcmask 130048
        %v578 = vsel %vm577, %v569, %v399
        %v579 = vsel %vm577, %v570, %v401
        %v580 = vsel %vm577, %v571, %v403
        %v581 = vsel %vm577, %v572, %v405
        %v582 = vsel %vm577, %v573, %v407
        %v583 = vsel %vm577, %v574, %v409
        %v584 = vsel %vm577, %v575, %v411
        %v585 = vsel %vm577, %v576, %v413
        %vm586 = vcmask 162816
        %v587 = vsel %vm586, %v578, %v431
        %v588 = vsel %vm586, %v579, %v433
        %v589 = vsel %vm586, %v580, %v435
        %v590 = vsel %vm586, %v581, %v437
        %v591 = vsel %vm586, %v582, %v439
        %v592 = vsel %vm586, %v583, %v441
        %v593 = vsel %vm586, %v584, %v443
        %v594 = vsel %vm586, %v585, %v445
        %vm595 = vcmask 195584
        %v596 = vsel %vm595, %v587, %v463
        %v597 = vsel %vm595, %v588, %v465
        %v598 = vsel %vm595, %v589, %v467
        %v599 = vsel %vm595, %v590, %v469
        %v600 = vsel %vm595, %v591, %v471
        %v601 = vsel %vm595, %v592, %v473
        %v602 = vsel %vm595, %v593, %v475
        %v603 = vsel %vm595, %v594, %v477
        %vm604 = vcmask 228352
        %v605 = vsel %vm604, %v596, %v495
        %v606 = vsel %vm604, %v597, %v497
        %v607 = vsel %vm604, %v598, %v499
        %v608 = vsel %vm604, %v599, %v501
        %v609 = vsel %vm604, %v600, %v503
        %v610 = vsel %vm604, %v601, %v505
        %v611 = vsel %vm604, %v602, %v507
        %v612 = vsel %vm604, %v603, %v509
        %vm613 = vcmask 261120
        %v614 = vsel %vm613, %v605, %v527
        %v615 = vsel %vm613, %v606, %v529
        %v616 = vsel %vm613, %v607, %v531
        %v617 = vsel %vm613, %v608, %v533
        %v618 = vsel %vm613, %v609, %v535
        %v619 = vsel %vm613, %v610, %v537
        %v620 = vsel %vm613, %v611, %v539
        %v621 = vsel %vm613, %v612, %v541
        %v622 = vld [vmem:[%s1] sm:$0xff]
        %v623 = vld [vmem:[%s1 + $0x8] sm:$0xff]
        %v624 = vld [vmem:[%s1 + $0x10] sm:$0xff]
        %v625 = vld [vmem:[%s1 + $0x18] sm:$0xff]
        %v626 = vld [vmem:[%s1 + $0x20] sm:$0xf]
        %vm627 = vcmask 293888
        %v629 = vsel %vm627, %v614, 0
        %v632 = vsel %vm627, %v615, 0
        %v635 = vsel %vm627, %v616, 0
        %v638 = vsel %vm627, %v617, 0
        %v641 = vsel %vm627, %v618, 0
        %v644 = vsel %vm627, %v619, 0
        %v647 = vsel %vm627, %v620, 0
        %v650 = vsel %vm627, %v621, 0
        %vm652 = vcmask 1043456
        %v654 = vsel %vm652, %v626, 0
        %656 = vmatprep.subr.mxu0 0.0
        %657 = vmatpush1.msra.mxu0 0.0
        %658 = vmatprep.subr.mxu0 0.0
        %659 = vmatpush1.msra.mxu0 0.0
        %660 = vmatprep.subr.mxu0 0.0
        %661 = vmatpush1.msra.mxu0 0.0
        %662 = vmatprep.subr.mxu0 0.0
        %663 = vmatpush1.msra.mxu0 0.0
        %664 = vmatprep.subr.mxu0 0.0
        %665 = vmatpush1.msra.mxu0 0.0
        %666 = vmatprep.subr.mxu0 0.0
        %667 = vmatpush1.msra.mxu0 0.0
        %668 = vmatprep.subr.mxu0 0.0
        %669 = vmatpush1.msra.mxu0 0.0
        %670 = vmatprep.subr.mxu0 0.0
        %671 = vmatpush1.msra.mxu0 0.0
        %672 = vmatprep.subr.mxu0 0.0
        %673 = vmatpush1.msra.mxu0 0.0
        %674 = vmatprep.subr.mxu0 0.0
        %675 = vmatpush1.msra.mxu0 0.0
        %676 = vmatprep.subr.mxu0 0.0
        %677 = vmatpush1.msra.mxu0 0.0
        %678 = vmatprep.subr.mxu0 0.0
        %679 = vmatpush1.msra.mxu0 %v654
        %680 = vmatprep.subr.mxu0 0.0
        %681 = vmatpush1.msra.mxu0 %v625
        %682 = vmatprep.subr.mxu0 0.0
        %683 = vmatpush1.msra.mxu0 %v624
        %684 = vmatprep.subr.mxu0 0.0
        %685 = vmatpush1.msra.mxu0 %v623
        %686 = vmatprep.subr.mxu0 0.0
        %687 = vmatpush1.msra.mxu0 %v622
        %688 = vmatprep.subr.mxu0 0.0
        %689 = vmatpush2.msra.mxu0 0.0
        %690 = vmatprep.subr.mxu0 0.0
        %691 = vmatpush2.msra.mxu0 0.0
        %692 = vmatprep.subr.mxu0 0.0
        %693 = vmatpush2.msra.mxu0 0.0
        %694 = vmatprep.subr.mxu0 0.0
        %695 = vmatpush2.msra.mxu0 0.0
        %696 = vmatprep.subr.mxu0 0.0
        %697 = vmatpush2.msra.mxu0 0.0
        %698 = vmatprep.subr.mxu0 0.0
        %699 = vmatpush2.msra.mxu0 0.0
        %700 = vmatprep.subr.mxu0 0.0
        %701 = vmatpush2.msra.mxu0 0.0
        %702 = vmatprep.subr.mxu0 0.0
        %703 = vmatpush2.msra.mxu0 0.0
        %704 = vmatprep.subr.mxu0 0.0
        %705 = vmatpush2.msra.mxu0 0.0
        %706 = vmatprep.subr.mxu0 0.0
        %707 = vmatpush2.msra.mxu0 0.0
        %708 = vmatprep.subr.mxu0 0.0
        %709 = vmatpush2.msra.mxu0 0.0
        %710 = vmatprep.subr.mxu0 0.0
        %711 = vmatpush2.msra.mxu0 0.0
        %712 = vmatprep.subr.mxu0 0.0
        %713 = vmatpush2.msra.mxu0 0.0
        %714 = vmatprep.subr.mxu0 0.0
        %715 = vmatpush2.msra.mxu0 0.0
        %716 = vmatprep.subr.mxu0 0.0
        %717 = vmatpush2.msra.mxu0 0.0
        %718 = vmatprep.subr.mxu0 0.0
        %719 = vmatpush2.msra.mxu0 0.0
        %720 = vmatprep.mubr.f32.mxu0 0.0
        %721 = vmatmul.mubr.f32.gmra.mxu0 %v629
        %v722 = vpop.f32.mrf.mxu0
        %v723 = vadd.f32 0.0, %v722
        %v724 = vpop.f32.mrf.mxu0
        %725 = vmatprep.mubr.f32.mxu0 0.0
        %726 = vmatmul.mubr.f32.gmra.mxu0 %v632
        %v727 = vpop.f32.mrf.mxu0
        %v728 = vadd.f32 0.0, %v727
        %v729 = vpop.f32.mrf.mxu0
        %730 = vmatprep.mubr.f32.mxu0 0.0
        %731 = vmatmul.mubr.f32.gmra.mxu0 %v635
        %v732 = vpop.f32.mrf.mxu0
        %v733 = vadd.f32 0.0, %v732
        %v734 = vpop.f32.mrf.mxu0
        %735 = vmatprep.mubr.f32.mxu0 0.0
        %736 = vmatmul.mubr.f32.gmra.mxu0 %v638
        %v737 = vpop.f32.mrf.mxu0
        %v738 = vadd.f32 0.0, %v737
        %v739 = vpop.f32.mrf.mxu0
        %740 = vmatprep.mubr.f32.mxu0 0.0
        %741 = vmatmul.mubr.f32.gmra.mxu0 %v641
        %v742 = vpop.f32.mrf.mxu0
        %v743 = vadd.f32 0.0, %v742
        %v744 = vpop.f32.mrf.mxu0
        %745 = vmatprep.mubr.f32.mxu0 0.0
        %746 = vmatmul.mubr.f32.gmra.mxu0 %v644
        %v747 = vpop.f32.mrf.mxu0
        %v748 = vadd.f32 0.0, %v747
        %v749 = vpop.f32.mrf.mxu0
        %750 = vmatprep.mubr.f32.mxu0 0.0
        %751 = vmatmul.mubr.f32.gmra.mxu0 %v647
        %v752 = vpop.f32.mrf.mxu0
        %v753 = vadd.f32 0.0, %v752
        %v754 = vpop.f32.mrf.mxu0
        %755 = vmatprep.mubr.f32.mxu0 0.0
        %756 = vmatmul.mubr.f32.gmra.mxu0 %v650
        %v757 = vpop.f32.mrf.mxu0
        %v758 = vadd.f32 0.0, %v757
        %v759 = vpop.f32.mrf.mxu0
        %760 = vdwg.mxu0
        %761 = vst.msk [vmem:[%s204] sm:$0xff] %vm559, %v723
        %762 = vst.msk [vmem:[%s204 + $0x8] sm:$0xff] %vm559, %v728
        %763 = vst.msk [vmem:[%s204 + $0x10] sm:$0xff] %vm559, %v733
        %764 = vst.msk [vmem:[%s204 + $0x18] sm:$0xff] %vm559, %v738
        %765 = vst.msk [vmem:[%s204 + $0x20] sm:$0xff] %vm559, %v743
        %766 = vst.msk [vmem:[%s204 + $0x28] sm:$0xff] %vm559, %v748
        %767 = vst.msk [vmem:[%s204 + $0x30] sm:$0xff] %vm559, %v753
        %768 = vst.msk [vmem:[%s204 + $0x38] sm:$0xff] %vm559, %v758
        %v769 = vsel %vm559, %v723, 0.0
        %v770 = vsel %vm559, %v728, 0.0
        %v771 = vadd.f32 %v769, %v770
        %v772 = vsel %vm559, %v733, 0.0
        %v773 = vadd.f32 %v771, %v772
        %v774 = vsel %vm559, %v738, 0.0
        %v775 = vadd.f32 %v773, %v774
        %v776 = vsel %vm559, %v743, 0.0
        %v777 = vadd.f32 %v775, %v776
        %v778 = vsel %vm559, %v748, 0.0
        %v779 = vadd.f32 %v777, %v778
        %v780 = vsel %vm559, %v753, 0.0
        %v781 = vadd.f32 %v779, %v780
        %v782 = vsel %vm559, %v758, 0.0
        %v783 = vadd.f32 %v781, %v782
        %v784 = vrot.slane %v783, 4
        %v785 = vadd.f32 %v783, %v784
        %v786 = vrot.slane %v785, 2
        %v787 = vadd.f32 %v785, %v786
        %v788 = vrot.slane %v787, 1
        %v789 = vadd.f32 %v787, %v788
        %v790 = vmul.f32 %v723, %v723
        %v791 = vmul.f32 %v728, %v728
        %v792 = vmul.f32 %v733, %v733
        %v793 = vmul.f32 %v738, %v738
        %v794 = vmul.f32 %v743, %v743
        %v795 = vmul.f32 %v748, %v748
        %v796 = vmul.f32 %v753, %v753
        %v797 = vmul.f32 %v758, %v758
        %v798 = vsel %vm559, %v790, 0.0
        %v799 = vsel %vm559, %v791, 0.0
        %v800 = vadd.f32 %v798, %v799
        %v801 = vsel %vm559, %v792, 0.0
        %v802 = vadd.f32 %v800, %v801
        %v803 = vsel %vm559, %v793, 0.0
        %v804 = vadd.f32 %v802, %v803
        %v805 = vsel %vm559, %v794, 0.0
        %v806 = vadd.f32 %v804, %v805
        %v807 = vsel %vm559, %v795, 0.0
        %v808 = vadd.f32 %v806, %v807
        %v809 = vsel %vm559, %v796, 0.0
        %v810 = vadd.f32 %v808, %v809
        %v811 = vsel %vm559, %v797, 0.0
        %v812 = vadd.f32 %v810, %v811
        %v813 = vrot.slane %v812, 4
        %v814 = vadd.f32 %v812, %v813
        %v815 = vrot.slane %v814, 2
        %v816 = vadd.f32 %v814, %v815
        %v817 = vrot.slane %v816, 1
        %v818 = vadd.f32 %v816, %v817
        %vm819 = vcmask 1040384
        %v820 = vsel %vm819, %v789, %v818
        %vm821 = vcmask 58368
        %822 = vst.msk [vmem:[%s191] sm:$0x3] %vm821, %v820
        %s823 = sadd.s32 %s22, %s23
        %s824 = smul.u32 8, %s823
        %p825 = scmp.lt.s32.totalorder %s824, 15
        %s826 = scalar_select %p825, %s824, 15
        %s827 = smul.addr %s826, 8
        %s828 = scalar_lea.vmem %s2, %s827
        %s829 = sand.u32 %s115, 1
        %s830 = scalar_lea.sflag [#allocation3], %s829
        %s831 = sand.u32 %s115, 1
        %s832 = smul.addr %s831, 2
        %s833 = scalar_lea.vmem [#allocation2], %s832
        // Predicated region
        $region29: #{tpu_custom_call.1} parent=27 // pred_check
          %p834 = pneg %p97
        $region30: #{tpu_custom_call.1} parent=27 // pred_check_branch
          %836 = sbr.rel (%p834) target = $region32
        $region31: #{tpu_custom_call.1} parent=27 // pred_region
          %s837 = sadd.s32 %s22, %s23
          %s838 = smul.u32 8, %s837
        $region32: #{tpu_custom_call.1} parent=27 // pred_fallthru
          _
        // Predicated region
        $region33: #{tpu_custom_call.1} parent=27 // pred_check
          %p839 = pneg %p125
        $region34: #{tpu_custom_call.1} parent=27 // pred_check_branch
          %841 = sbr.rel (%p839) target = $region36
        $region35: #{tpu_custom_call.1} parent=27 // pred_region
          %s842 = sadd.s32 %s22, %s23
          %s844 = ssub.s32 32, 32
          %845 = vsyncadd %s830, %s844
          %s846 = smul.addr %s842, 32
          %s847 = scalar_lea.hbm %s3, %s846
          %s849 = sshll.u32 %s833, 4
          %s850 = int_to_ptr.vmem [resolvable:$true] %s849
          %852 = dma.vmem_to_hbm [thread:$0]  %s850, 32, %s847, %s830
        $region36: #{tpu_custom_call.1} parent=27 // pred_fallthru
          _
      $region28: #{tpu_custom_call.1} parent=5 // pred_fallthru
        _
      %p853 = scmp.le.s32.totalorder 2, %s13
      // Predicated region
      $region37: #{tpu_custom_call.1} parent=5 // pred_check
        %p854 = pneg %p853
      $region38: #{tpu_custom_call.1} parent=5 // pred_check_branch
        %856 = sbr.rel (%p854) target = $region40
      $region39: #{tpu_custom_call.1} parent=5 // pred_region
        %s857 = ssub.s32 %s13, 2
        // Predicated region
        $region41: #{tpu_custom_call.1} parent=39 // pred_check
          %p858 = pneg %p103
        $region42: #{tpu_custom_call.1} parent=39 // pred_check_branch
          %860 = sbr.rel (%p858) target = $region44
        $region43: #{tpu_custom_call.1} parent=39 // pred_region
          %s861 = sadd.s32 %s24, %s25
          %s862 = smul.u32 8, %s861
          %p863 = scmp.lt.s32.totalorder %s862, 15
          %s864 = scalar_select %p863, %s862, 15
          %s865 = smul.addr %s864, 8
          %s866 = scalar_lea.vmem %s2, %s865
        $region44: #{tpu_custom_call.1} parent=39 // pred_fallthru
          _
        // Predicated region
        $region45: #{tpu_custom_call.1} parent=39 // pred_check
          %p867 = pneg %p131
        $region46: #{tpu_custom_call.1} parent=39 // pred_check_branch
          %869 = sbr.rel (%p867) target = $region48
        $region47: #{tpu_custom_call.1} parent=39 // pred_region
          %s870 = sand.u32 %s116, 1
          %s871 = scalar_lea.sflag [#allocation3], %s870
          %s872 = sand.u32 %s116, 1
          %s873 = smul.addr %s872, 2
          %s874 = scalar_lea.vmem [#allocation2], %s873
          %875 = dma.done %s871, 32
        $region48: #{tpu_custom_call.1} parent=39 // pred_fallthru
          _
      $region40: #{tpu_custom_call.1} parent=5 // pred_fallthru
        _
    $region6: #{tpu_custom_call.1} parent=1 // loop_footer
      %s17 = sadd.s32 1, %s13
    $region7: #{tpu_custom_call.1} parent=1 // loop_footer_branch
      %12 = sbr.rel target = $region3
    $region8: #{tpu_custom_call.1} parent=1 // loop_exit
      _
    %876 = vsyncpa [#allocation3], 1
    %s877 = scalar_lea.sflag [#allocation3], 1
    %878 = vsyncpa %s877, 1

// kernel: tpu_custom_call.1
$region0: #{tpu_custom_call.1}
  #allocation0 [shape = 'u32[]', space=smem, size = 0x4, offset = 0x4, fixed_abs, tag = 'smem constant byte address 0x4 - core index']
  #allocation1 [shape = 'u32[144,128]{1,0:T(1,128)}', space=vmem, size = 0x12000, scoped, tag = 'internal scratch']
  %s0 = inlined_call_operand.vmem [shape: f32[8,9,9,4], index: 0, kind: input, shape index: {}]
  %s1 = inlined_call_operand.vmem [shape: f32[36,8], index: 1, kind: input, shape index: {}]
  %s2 = inlined_call_operand.vmem [shape: f32[128,8], index: 2, kind: output, shape index: {0}]
  %s3 = inlined_call_operand.hbm [shape: f32[2,2,8], index: 3, kind: output, shape index: {1}]
  %4 = xla_tuple %s2, %s3
  %s5 = sld [smem:[#allocation0]]
  $region49: #{tpu_custom_call.1} parent=0
    _
  %s7 = ssub.s32 1, %s5
  %s8 = scalar_select 0, %s7, %s5
  $region1: #{tpu_custom_call.1} parent=0
    #allocation2 [shape = 'u8[2048]{0}', space=vmem, size = 0x800, scoped, tag = 'output window, operand 1']
    #allocation3 [shape = 's32[2]{0}', space=sflag, size = 0x8, scoped, tag = 'scoped memory for tpu_custom_call.1']
    %9 = vsyncpa [#allocation3], 0
    %s10 = scalar_lea.sflag [#allocation3], 1
    %11 = vsyncpa %s10, 0
    loop: start=0, step=1, limit=4
    $region2: #{tpu_custom_call.1} parent=1 // loop_pre_header
      _
    $region3: #{tpu_custom_call.1} parent=1 // loop_header
      %s13 = sphi 0, %s17
      %p14 = scmp.ge.s32.totalorder %s13, 4
      %s20 = sphi 0, %s32
      %s21 = sphi 0, %s28
      %s22 = sphi 0, %s20
      %s23 = sphi 0, %s21
      %s24 = sphi 0, %s22
      %s25 = sphi 0, %s23
      %s35 = sphi 0, %s37
      %s38 = sphi 0, %s35
      %s39 = sphi 0, %s38
      %s55 = sphi 0, %s39
      %s59 = sphi 0, %s59
      %s61 = sphi 0, %s59
      %s62 = sphi 0, %s61
      %s76 = sphi 0, %s62
      %s84 = sphi 0, %s86
      %s87 = sphi 0, %s84
      %s88 = sphi 0, %s87
      %s104 = sphi 0, %s88
      %s112 = sphi 0, %s114
      %s115 = sphi 0, %s112
      %s116 = sphi 0, %s115
      %s132 = sphi 0, %s116
    $region4: #{tpu_custom_call.1} parent=1 // loop_header_branch
      %16 = sbr.rel (%p14) target = $region8
    $region5: #{tpu_custom_call.1} parent=1 // loop_body
      %s18 = ssub.s32 %s13, 1
      %s19 = ssub.s32 %s13, 2
      %s26 = sadd.s32 1, %s21
      %p27 = scmp.ge.s32.totalorder %s26, 1
      %s28 = scalar_select %p27, 0, %s26
      %s29 = sadd.s32 1, %s20
      %s30 = scalar_select %p27, %s29, %s20
      %p31 = scmp.ge.s32.totalorder %s30, 2
      %s32 = scalar_select %p31, 0, %s30
      %s33 = ssub.s32 %s20, %s32
      %p34 = scmp.eq.s32.totalorder %s33, 0
      %s36 = sadd.s32 %s35, 1
      %s37 = scalar_select %p34, %s35, %s36
      %p40 = pneg %p34
      %p41 = scmp.eq.s32.totalorder %s13, 1
      %p42 = por %p40, %p41
      %p43 = scmp.ne.s32.totalorder %s35, %s38
      %p44 = scmp.eq.s32.totalorder %s13, 0
      %p45 = por %p43, %p44
      %p46 = scmp.ne.s32.totalorder %s35, %s38
      %p47 = scmp.eq.s32.totalorder %s18, 1
      %p48 = por %p46, %p47
      %p49 = scmp.ne.s32.totalorder %s38, %s39
      %p50 = scmp.eq.s32.totalorder %s18, 0
      %p51 = por %p49, %p50
      %p52 = scmp.ne.s32.totalorder %s38, %s39
      %p53 = scmp.eq.s32.totalorder %s19, 1
      %p54 = por %p52, %p53
      %p56 = scmp.ne.s32.totalorder %s39, %s55
      %p57 = scmp.eq.s32.totalorder %s19, 0
      %p58 = por %p56, %p57
      %s60 = sadd.s32 %s59, 1
      %p63 = scmp.eq.s32.totalorder %s13, 1
      %p64 = scmp.ne.s32.totalorder %s59, %s61
      %p65 = scmp.eq.s32.totalorder %s13, 0
      %p66 = por %p64, %p65
      %p67 = scmp.ne.s32.totalorder %s59, %s61
      %p68 = scmp.eq.s32.totalorder %s18, 1
      %p69 = por %p67, %p68
      %p70 = scmp.ne.s32.totalorder %s61, %s62
      %p71 = scmp.eq.s32.totalorder %s18, 0
      %p72 = por %p70, %p71
      %p73 = scmp.ne.s32.totalorder %s61, %s62
      %p74 = scmp.eq.s32.totalorder %s19, 1
      %p75 = por %p73, %p74
      %p77 = scmp.ne.s32.totalorder %s62, %s76
      %p78 = scmp.eq.s32.totalorder %s19, 0
      %p79 = por %p77, %p78
      %s80 = sadd.s32 %s20, %s21
      %s81 = sadd.s32 %s32, %s28
      %s82 = ssub.s32 %s80, %s81
      %p83 = scmp.eq.s32.totalorder %s82, 0
      %s85 = sadd.s32 %s84, 1
      %s86 = scalar_select %p83, %s84, %s85
      %p89 = pneg %p83
      %p90 = scmp.eq.s32.totalorder %s13, 1
      %p91 = por %p89, %p90
      %p92 = scmp.ne.s32.totalorder %s84, %s87
      %p93 = scmp.eq.s32.totalorder %s13, 0
      %p94 = por %p92, %p93
      %p95 = scmp.ne.s32.totalorder %s84, %s87
      %p96 = scmp.eq.s32.totalorder %s18, 1
      %p97 = por %p95, %p96
      %p98 = scmp.ne.s32.totalorder %s87, %s88
      %p99 = scmp.eq.s32.totalorder %s18, 0
      %p100 = por %p98, %p99
      %p101 = scmp.ne.s32.totalorder %s87, %s88
      %p102 = scmp.eq.s32.totalorder %s19, 1
      %p103 = por %p101, %p102
      %p105 = scmp.ne.s32.totalorder %s88, %s104
      %p106 = scmp.eq.s32.totalorder %s19, 0
      %p107 = por %p105, %p106
      %s108 = sadd.s32 %s20, %s21
      %s109 = sadd.s32 %s32, %s28
      %s110 = ssub.s32 %s108, %s109
      %p111 = scmp.eq.s32.totalorder %s110, 0
      %s113 = sadd.s32 %s112, 1
      %s114 = scalar_select %p111, %s112, %s113
      %p117 = pneg %p111
      %p118 = scmp.eq.s32.totalorder %s13, 1
      %p119 = por %p117, %p118
      %p120 = scmp.ne.s32.totalorder %s112, %s115
      %p121 = scmp.eq.s32.totalorder %s13, 0
      %p122 = por %p120, %p121
      %p123 = scmp.ne.s32.totalorder %s112, %s115
      %p124 = scmp.eq.s32.totalorder %s18, 1
      %p125 = por %p123, %p124
      %p126 = scmp.ne.s32.totalorder %s115, %s116
      %p127 = scmp.eq.s32.totalorder %s18, 0
      %p128 = por %p126, %p127
      %p129 = scmp.ne.s32.totalorder %s115, %s116
      %p130 = scmp.eq.s32.totalorder %s19, 1
      %p131 = por %p129, %p130
      %p133 = scmp.ne.s32.totalorder %s116, %s132
      %p134 = scmp.eq.s32.totalorder %s19, 0
      %p135 = por %p133, %p134
      %p136 = scmp.le.s32.totalorder 1, %s13
      %p137 = scmp.lt.s32.totalorder %s13, 3
      %p138 = pnand %p136, %p137
      %p139 = pneg %p138
      // Predicated region
      $region9: #{tpu_custom_call.1} parent=5 // pred_check
        _
      $region10: #{tpu_custom_call.1} parent=5 // pred_check_branch
        %141 = sbr.rel (%p138) target = $region12
      $region11: #{tpu_custom_call.1} parent=5 // pred_region
        %s142 = ssub.s32 %s13, 1
        // Predicated region
        $region13: #{tpu_custom_call.1} parent=11 // pred_check
          %p143 = pneg %p72
        $region14: #{tpu_custom_call.1} parent=11 // pred_check_branch
          %145 = sbr.rel (%p143) target = $region16
        $region15: #{tpu_custom_call.1} parent=11 // pred_region
          _
        $region16: #{tpu_custom_call.1} parent=11 // pred_fallthru
          _
      $region12: #{tpu_custom_call.1} parent=5 // pred_fallthru
        _
      %p146 = scmp.lt.s32.totalorder %s13, 2
      // Predicated region
      $region17: #{tpu_custom_call.1} parent=5 // pred_check
        %p147 = pneg %p146
      $region18: #{tpu_custom_call.1} parent=5 // pred_check_branch
        %149 = sbr.rel (%p147) target = $region20
      $region19: #{tpu_custom_call.1} parent=5 // pred_region
        // Predicated region
        $region21: #{tpu_custom_call.1} parent=19 // pred_check
          %p150 = pneg %p45
        $region22: #{tpu_custom_call.1} parent=19 // pred_check_branch
          %152 = sbr.rel (%p150) target = $region24
        $region23: #{tpu_custom_call.1} parent=19 // pred_region
          %s153 = smul.u32 4, %s20
          %p154 = scmp.lt.s32.totalorder %s153, 7
          %s155 = scalar_select %p154, %s153, 7
          %s156 = smul.addr %s155, 18
          %s157 = smul.addr %s156, 8
          %s158 = scalar_lea.vmem %s0, %s157
          %s159 = smul.u32 4, %s20
        $region24: #{tpu_custom_call.1} parent=19 // pred_fallthru
          _
      $region20: #{tpu_custom_call.1} parent=5 // pred_fallthru
        _
      %p160 = scmp.le.s32.totalorder 1, %s13
      %p161 = scmp.lt.s32.totalorder %s13, 3
      %p162 = pnand %p160, %p161
      %p163 = pneg %p162
      // Predicated region
      $region25: #{tpu_custom_call.1} parent=5 // pred_check
        _
      $region26: #{tpu_custom_call.1} parent=5 // pred_check_branch
        %165 = sbr.rel (%p162) target = $region28
      $region27: #{tpu_custom_call.1} parent=5 // pred_region
        %s166 = ssub.s32 %s13, 1
        %s167 = smul.u32 4, %s22
        %p168 = scmp.lt.s32.totalorder %s167, 7
        %s169 = scalar_select %p168, %s167, 7
        %s170 = smul.addr %s169, 18
        %s171 = smul.addr %s170, 8
        %s172 = scalar_lea.vmem %s0, %s171
        %p173 = pneg %p51
        %p174 = pneg %p48
        %p175 = pneg %p72
        %p176 = pneg %p69
        %p177 = pneg %p100
        %p178 = pneg %p97
        %s179 = sadd.s32 %s22, %s23
        %s180 = smul.u32 8, %s179
        %p181 = scmp.lt.s32.totalorder %s180, 15
        %s182 = scalar_select %p181, %s180, 15
        %s183 = smul.addr %s182, 8
        %s184 = scalar_lea.vmem %s2, %s183
        %p185 = pneg %p128
        %p186 = pneg %p125
        %s187 = sand.u32 %s115, 1
        %s188 = scalar_lea.sflag [#allocation3], %s187
        %s189 = sand.u32 %s115, 1
        %s190 = smul.addr %s189, 2
        %s191 = scalar_lea.vmem [#allocation2], %s190
        %s192 = smul.u32 4, %s22
        %p193 = scmp.lt.s32.totalorder %s192, 7
        %s194 = scalar_select %p193, %s192, 7
        %s195 = smul.addr %s194, 18
        %s196 = smul.addr %s195, 8
        %s197 = scalar_lea.vmem %s0, %s196
        %s198 = smul.u32 4, %s22
        %s199 = sadd.s32 %s22, %s23
        %s200 = smul.u32 8, %s199
        %p201 = scmp.lt.s32.totalorder %s200, 15
        %s202 = scalar_select %p201, %s200, 15
        %s203 = smul.addr %s202, 8
        %s204 = scalar_lea.vmem %s2, %s203
        %s205 = sadd.s32 %s22, %s23
        %s206 = smul.u32 8, %s205
        %s207 = sadd.s32 %s22, %s23
        %s208 = smul.u32 %s23, 8
        %s209 = smul.u32 %s208, 16
        %s210 = scalar_lea.vmem %s197, %s209
        %v211 = vld [vmem:[%s210] sm:$0xff]
        %v212 = vld [vmem:[%s210 + $0x10] sm:$0xff]
        %v213 = vld [vmem:[%s210 + $0x20] sm:$0xff]
        %v214 = vld [vmem:[%s210 + $0x30] sm:$0xff]
        %v215 = vld [vmem:[%s210 + $0x40] sm:$0xff]
        %v216 = vld [vmem:[%s210 + $0x50] sm:$0xff]
        %v217 = vld [vmem:[%s210 + $0x60] sm:$0xff]
        %v218 = vld [vmem:[%s210 + $0x70] sm:$0xff]
        %s219 = sadd.s32 %s209, 144
        %s220 = scalar_lea.vmem %s197, %s219
        %v221 = vld [vmem:[%s220] sm:$0xff]
        %v222 = vld [vmem:[%s220 + $0x10] sm:$0xff]
        %v223 = vld [vmem:[%s220 + $0x20] sm:$0xff]
        %v224 = vld [vmem:[%s220 + $0x30] sm:$0xff]
        %v225 = vld [vmem:[%s220 + $0x40] sm:$0xff]
        %v226 = vld [vmem:[%s220 + $0x50] sm:$0xff]
        %v227 = vld [vmem:[%s220 + $0x60] sm:$0xff]
        %v228 = vld [vmem:[%s220 + $0x70] sm:$0xff]
        %v229 = vld [vmem:[%s210 + $0x1] sm:$0xff]
        %v230 = vld [vmem:[%s210 + $0x11] sm:$0xff]
        %v231 = vld [vmem:[%s210 + $0x21] sm:$0xff]
        %v232 = vld [vmem:[%s210 + $0x31] sm:$0xff]
        %v233 = vld [vmem:[%s210 + $0x41] sm:$0xff]
        %v234 = vld [vmem:[%s210 + $0x51] sm:$0xff]
        %v235 = vld [vmem:[%s210 + $0x61] sm:$0xff]
        %v236 = vld [vmem:[%s210 + $0x71] sm:$0xff]
        %s237 = sadd.s32 %s209, 288
        %s238 = scalar_lea.vmem %s197, %s237
        %v239 = vld [vmem:[%s238] sm:$0xff]
        %v240 = vld [vmem:[%s238 + $0x10] sm:$0xff]
        %v241 = vld [vmem:[%s238 + $0x20] sm:$0xff]
        %v242 = vld [vmem:[%s238 + $0x30] sm:$0xff]
        %v243 = vld [vmem:[%s238 + $0x40] sm:$0xff]
        %v244 = vld [vmem:[%s238 + $0x50] sm:$0xff]
        %v245 = vld [vmem:[%s238 + $0x60] sm:$0xff]
        %v246 = vld [vmem:[%s238 + $0x70] sm:$0xff]
        %s247 = sadd.s32 %s209, 432
        %s248 = scalar_lea.vmem %s197, %s247
        %v249 = vld [vmem:[%s248] sm:$0xff]
        %v250 = vld [vmem:[%s248 + $0x10] sm:$0xff]
        %v251 = vld [vmem:[%s248 + $0x20] sm:$0xff]
        %v252 = vld [vmem:[%s248 + $0x30] sm:$0xff]
        %v253 = vld [vmem:[%s248 + $0x40] sm:$0xff]
        %v254 = vld [vmem:[%s248 + $0x50] sm:$0xff]
        %v255 = vld [vmem:[%s248 + $0x60] sm:$0xff]
        %v256 = vld [vmem:[%s248 + $0x70] sm:$0xff]
        %v257 = vld [vmem:[%s238 + $0x1] sm:$0xff]
        %v258 = vld [vmem:[%s238 + $0x11] sm:$0xff]
        %v259 = vld [vmem:[%s238 + $0x21] sm:$0xff]
        %v260 = vld [vmem:[%s238 + $0x31] sm:$0xff]
        %v261 = vld [vmem:[%s238 + $0x41] sm:$0xff]
        %v262 = vld [vmem:[%s238 + $0x51] sm:$0xff]
        %v263 = vld [vmem:[%s238 + $0x61] sm:$0xff]
        %v264 = vld [vmem:[%s238 + $0x71] sm:$0xff]
        %s265 = sadd.s32 %s208, 1
        %s266 = smul.u32 %s265, 16
        %s267 = scalar_lea.vmem %s197, %s266
        %v268 = vld [vmem:[%s267] sm:$0xff]
        %v269 = vld [vmem:[%s267 + $0x10] sm:$0xff]
        %v270 = vld [vmem:[%s267 + $0x20] sm:$0xff]
        %v271 = vld [vmem:[%s267 + $0x30] sm:$0xff]
        %v272 = vld [vmem:[%s267 + $0x40] sm:$0xff]
        %v273 = vld [vmem:[%s267 + $0x50] sm:$0xff]
        %v274 = vld [vmem:[%s267 + $0x60] sm:$0xff]
        %v275 = vld [vmem:[%s267 + $0x70] sm:$0xff]
        %s276 = sadd.s32 %s266, 144
        %s277 = scalar_lea.vmem %s197, %s276
        %v278 = vld [vmem:[%s277] sm:$0xff]
        %v279 = vld [vmem:[%s277 + $0x10] sm:$0xff]
        %v280 = vld [vmem:[%s277 + $0x20] sm:$0xff]
        %v281 = vld [vmem:[%s277 + $0x30] sm:$0xff]
        %v282 = vld [vmem:[%s277 + $0x40] sm:$0xff]
        %v283 = vld [vmem:[%s277 + $0x50] sm:$0xff]
        %v284 = vld [vmem:[%s277 + $0x60] sm:$0xff]
        %v285 = vld [vmem:[%s277 + $0x70] sm:$0xff]
        %v286 = vld [vmem:[%s267 + $0x1] sm:$0xff]
        %v287 = vld [vmem:[%s267 + $0x11] sm:$0xff]
        %v288 = vld [vmem:[%s267 + $0x21] sm:$0xff]
        %v289 = vld [vmem:[%s267 + $0x31] sm:$0xff]
        %v290 = vld [vmem:[%s267 + $0x41] sm:$0xff]
        %v291 = vld [vmem:[%s267 + $0x51] sm:$0xff]
        %v292 = vld [vmem:[%s267 + $0x61] sm:$0xff]
        %v293 = vld [vmem:[%s267 + $0x71] sm:$0xff]
        %v294 = vld [vmem:[%s1] sm:$0xf]
        %v295 = vld [vmem:[%s1 + $0x4] sm:$0xf]
        %vm296 = vcmask 31744
        %v298 = vsel %vm296, %v221, 0
        %v301 = vsel %vm296, %v222, 0
        %v304 = vsel %vm296, %v223, 0
        %v307 = vsel %vm296, %v224, 0
        %v310 = vsel %vm296, %v225, 0
        %v313 = vsel %vm296, %v226, 0
        %v316 = vsel %vm296, %v227, 0
        %v319 = vsel %vm296, %v228, 0
        %vm321 = vcmask 1043456
        %v323 = vsel %vm321, %v295, 0
        %325 = vmatprep.subr.mxu0 0.0
        %326 = vmatpush1.msra.mxu0 0.0
        %327 = vmatprep.subr.mxu0 0.0
        %328 = vmatpush1.msra.mxu0 0.0
        %329 = vmatprep.subr.mxu0 0.0
        %330 = vmatpush1.msra.mxu0 0.0
        %331 = vmatprep.subr.mxu0 0.0
        %332 = vmatpush1.msra.mxu0 0.0
        %333 = vmatprep.subr.mxu0 0.0
        %334 = vmatpush1.msra.mxu0 0.0
        %335 = vmatprep.subr.mxu0 0.0
        %336 = vmatpush1.msra.mxu0 0.0
        %337 = vmatprep.subr.mxu0 0.0
        %338 = vmatpush1.msra.mxu0 0.0
        %339 = vmatprep.subr.mxu0 0.0
        %340 = vmatpush1.msra.mxu0 0.0
        %341 = vmatprep.subr.mxu0 0.0
        %342 = vmatpush1.msra.mxu0 0.0
        %343 = vmatprep.subr.mxu0 0.0
        %344 = vmatpush1.msra.mxu0 0.0
        %345 = vmatprep.subr.mxu0 0.0
        %346 = vmatpush1.msra.mxu0 0.0
        %347 = vmatprep.subr.mxu0 0.0
        %348 = vmatpush1.msra.mxu0 0.0
        %349 = vmatprep.subr.mxu0 0.0
        %350 = vmatpush1.msra.mxu0 0.0
        %351 = vmatprep.subr.mxu0 0.0
        %352 = vmatpush1.msra.mxu0 0.0
        %353 = vmatprep.subr.mxu0 0.0
        %354 = vmatpush1.msra.mxu0 0.0
        %355 = vmatprep.subr.mxu0 0.0
        %356 = vmatpush1.msra.mxu0 %v323
        %357 = vmatprep.subr.mxu0 0.0
        %358 = vmatpush2.msra.mxu0 0.0
        %359 = vmatprep.subr.mxu0 0.0
        %360 = vmatpush2.msra.mxu0 0.0
        %361 = vmatprep.subr.mxu0 0.0
        %362 = vmatpush2.msra.mxu0 0.0
        %363 = vmatprep.subr.mxu0 0.0
        %364 = vmatpush2.msra.mxu0 0.0
        %365 = vmatprep.subr.mxu0 0.0
        %366 = vmatpush2.msra.mxu0 0.0
        %367 = vmatprep.subr.mxu0 0.0
        %368 = vmatpush2.msra.mxu0 0.0
        %369 = vmatprep.subr.mxu0 0.0
        %370 = vmatpush2.msra.mxu0 0.0
        %371 = vmatprep.subr.mxu0 0.0
        %372 = vmatpush2.msra.mxu0 0.0
        %373 = vmatprep.subr.mxu0 0.0
        %374 = vmatpush2.msra.mxu0 0.0
        %375 = vmatprep.subr.mxu0 0.0
        %376 = vmatpush2.msra.mxu0 0.0
        %377 = vmatprep.subr.mxu0 0.0
        %378 = vmatpush2.msra.mxu0 0.0
        %379 = vmatprep.subr.mxu0 0.0
        %380 = vmatpush2.msra.mxu0 0.0
        %381 = vmatprep.subr.mxu0 0.0
        %382 = vmatpush2.msra.mxu0 0.0
        %383 = vmatprep.subr.mxu0 0.0
        %384 = vmatpush2.msra.mxu0 0.0
        %385 = vmatprep.subr.mxu0 0.0
        %386 = vmatpush2.msra.mxu0 0.0
        %387 = vmatprep.subr.mxu0 0.0
        %388 = vmatpush2.msra.mxu0 0.0
        %389 = vmatprep.mubr.f32.mxu0 0.0
        %390 = vmatmul.mubr.f32.gmra.mxu0 %v298
        %v391 = vpop.f32.mrf.mxu0
        %v392 = vadd.f32 0.0, %v391
        %v393 = vpop.f32.mrf.mxu0
        %394 = vmatprep.mubr.f32.mxu0 0.0
        %395 = vmatmul.mubr.f32.gmra.mxu0 %v301
        %v396 = vpop.f32.mrf.mxu0
        %v397 = vadd.f32 0.0, %v396
        %v398 = vpop.f32.mrf.mxu0
        %399 = vmatprep.mubr.f32.mxu0 0.0
        %400 = vmatmul.mubr.f32.gmra.mxu0 %v304
        %v401 = vpop.f32.mrf.mxu0
        %v402 = vadd.f32 0.0, %v401
        %v403 = vpop.f32.mrf.mxu0
        %404 = vmatprep.mubr.f32.mxu0 0.0
        %405 = vmatmul.mubr.f32.gmra.mxu0 %v307
        %v406 = vpop.f32.mrf.mxu0
        %v407 = vadd.f32 0.0, %v406
        %v408 = vpop.f32.mrf.mxu0
        %409 = vmatprep.mubr.f32.mxu0 0.0
        %410 = vmatmul.mubr.f32.gmra.mxu0 %v310
        %v411 = vpop.f32.mrf.mxu0
        %v412 = vadd.f32 0.0, %v411
        %v413 = vpop.f32.mrf.mxu0
        %414 = vmatprep.mubr.f32.mxu0 0.0
        %415 = vmatmul.mubr.f32.gmra.mxu0 %v313
        %v416 = vpop.f32.mrf.mxu0
        %v417 = vadd.f32 0.0, %v416
        %v418 = vpop.f32.mrf.mxu0
        %419 = vmatprep.mubr.f32.mxu0 0.0
        %420 = vmatmul.mubr.f32.gmra.mxu0 %v316
        %v421 = vpop.f32.mrf.mxu0
        %v422 = vadd.f32 0.0, %v421
        %v423 = vpop.f32.mrf.mxu0
        %424 = vmatprep.mubr.f32.mxu0 0.0
        %425 = vmatmul.mubr.f32.gmra.mxu0 %v319
        %v426 = vpop.f32.mrf.mxu0
        %v427 = vadd.f32 0.0, %v426
        %v428 = vpop.f32.mrf.mxu0
        %429 = vdwg.mxu0
        %v431 = vsel %vm296, %v211, 0
        %v434 = vsel %vm296, %v212, 0
        %v437 = vsel %vm296, %v213, 0
        %v440 = vsel %vm296, %v214, 0
        %v443 = vsel %vm296, %v215, 0
        %v446 = vsel %vm296, %v216, 0
        %v449 = vsel %vm296, %v217, 0
        %v452 = vsel %vm296, %v218, 0
        %v455 = vsel %vm321, %v294, 0
        %457 = vmatprep.subr.mxu0 0.0
        %458 = vmatpush1.msra.mxu0 0.0
        %459 = vmatprep.subr.mxu0 0.0
        %460 = vmatpush1.msra.mxu0 0.0
        %461 = vmatprep.subr.mxu0 0.0
        %462 = vmatpush1.msra.mxu0 0.0
        %463 = vmatprep.subr.mxu0 0.0
        %464 = vmatpush1.msra.mxu0 0.0
        %465 = vmatprep.subr.mxu0 0.0
        %466 = vmatpush1.msra.mxu0 0.0
        %467 = vmatprep.subr.mxu0 0.0
        %468 = vmatpush1.msra.mxu0 0.0
        %469 = vmatprep.subr.mxu0 0.0
        %470 = vmatpush1.msra.mxu0 0.0
        %471 = vmatprep.subr.mxu0 0.0
        %472 = vmatpush1.msra.mxu0 0.0
        %473 = vmatprep.subr.mxu0 0.0
        %474 = vmatpush1.msra.mxu0 0.0
        %475 = vmatprep.subr.mxu0 0.0
        %476 = vmatpush1.msra.mxu0 0.0
        %477 = vmatprep.subr.mxu0 0.0
        %478 = vmatpush1.msra.mxu0 0.0
        %479 = vmatprep.subr.mxu0 0.0
        %480 = vmatpush1.msra.mxu0 0.0
        %481 = vmatprep.subr.mxu0 0.0
        %482 = vmatpush1.msra.mxu0 0.0
        %483 = vmatprep.subr.mxu0 0.0
        %484 = vmatpush1.msra.mxu0 0.0
        %485 = vmatprep.subr.mxu0 0.0
        %486 = vmatpush1.msra.mxu0 0.0
        %487 = vmatprep.subr.mxu0 0.0
        %488 = vmatpush1.msra.mxu0 %v455
        %489 = vmatprep.subr.mxu0 0.0
        %490 = vmatpush2.msra.mxu0 0.0
        %491 = vmatprep.subr.mxu0 0.0
        %492 = vmatpush2.msra.mxu0 0.0
        %493 = vmatprep.subr.mxu0 0.0
        %494 = vmatpush2.msra.mxu0 0.0
        %495 = vmatprep.subr.mxu0 0.0
        %496 = vmatpush2.msra.mxu0 0.0
        %497 = vmatprep.subr.mxu0 0.0
        %498 = vmatpush2.msra.mxu0 0.0
        %499 = vmatprep.subr.mxu0 0.0
        %500 = vmatpush2.msra.mxu0 0.0
        %501 = vmatprep.subr.mxu0 0.0
        %502 = vmatpush2.msra.mxu0 0.0
        %503 = vmatprep.subr.mxu0 0.0
        %504 = vmatpush2.msra.mxu0 0.0
        %505 = vmatprep.subr.mxu0 0.0
        %506 = vmatpush2.msra.mxu0 0.0
        %507 = vmatprep.subr.mxu0 0.0
        %508 = vmatpush2.msra.mxu0 0.0
        %509 = vmatprep.subr.mxu0 0.0
        %510 = vmatpush2.msra.mxu0 0.0
        %511 = vmatprep.subr.mxu0 0.0
        %512 = vmatpush2.msra.mxu0 0.0
        %513 = vmatprep.subr.mxu0 0.0
        %514 = vmatpush2.msra.mxu0 0.0
        %515 = vmatprep.subr.mxu0 0.0
        %516 = vmatpush2.msra.mxu0 0.0
        %517 = vmatprep.subr.mxu0 0.0
        %518 = vmatpush2.msra.mxu0 0.0
        %519 = vmatprep.subr.mxu0 0.0
        %520 = vmatpush2.msra.mxu0 0.0
        %521 = vmatprep.mubr.f32.mxu0 0.0
        %522 = vmatmul.mubr.f32.gmra.mxu0 %v431
        %v523 = vpop.f32.mrf.mxu0
        %v524 = vadd.f32 %v392, %v523
        %v525 = vpop.f32.mrf.mxu0
        %526 = vmatprep.mubr.f32.mxu0 0.0
        %527 = vmatmul.mubr.f32.gmra.mxu0 %v434
        %v528 = vpop.f32.mrf.mxu0
        %v529 = vadd.f32 %v397, %v528
        %v530 = vpop.f32.mrf.mxu0
        %531 = vmatprep.mubr.f32.mxu0 0.0
        %532 = vmatmul.mubr.f32.gmra.mxu0 %v437
        %v533 = vpop.f32.mrf.mxu0
        %v534 = vadd.f32 %v402, %v533
        %v535 = vpop.f32.mrf.mxu0
        %536 = vmatprep.mubr.f32.mxu0 0.0
        %537 = vmatmul.mubr.f32.gmra.mxu0 %v440
        %v538 = vpop.f32.mrf.mxu0
        %v539 = vadd.f32 %v407, %v538
        %v540 = vpop.f32.mrf.mxu0
        %541 = vmatprep.mubr.f32.mxu0 0.0
        %542 = vmatmul.mubr.f32.gmra.mxu0 %v443
        %v543 = vpop.f32.mrf.mxu0
        %v544 = vadd.f32 %v412, %v543
        %v545 = vpop.f32.mrf.mxu0
        %546 = vmatprep.mubr.f32.mxu0 0.0
        %547 = vmatmul.mubr.f32.gmra.mxu0 %v446
        %v548 = vpop.f32.mrf.mxu0
        %v549 = vadd.f32 %v417, %v548
        %v550 = vpop.f32.mrf.mxu0
        %551 = vmatprep.mubr.f32.mxu0 0.0
        %552 = vmatmul.mubr.f32.gmra.mxu0 %v449
        %v553 = vpop.f32.mrf.mxu0
        %v554 = vadd.f32 %v422, %v553
        %v555 = vpop.f32.mrf.mxu0
        %556 = vmatprep.mubr.f32.mxu0 0.0
        %557 = vmatmul.mubr.f32.gmra.mxu0 %v452
        %v558 = vpop.f32.mrf.mxu0
        %v559 = vadd.f32 %v427, %v558
        %v560 = vpop.f32.mrf.mxu0
        %561 = vdwg.mxu0
        %v562 = vld [vmem:[%s1 + $0x8] sm:$0xf]
        %v564 = vsel %vm296, %v229, 0
        %v567 = vsel %vm296, %v230, 0
        %v570 = vsel %vm296, %v231, 0
        %v573 = vsel %vm296, %v232, 0
        %v576 = vsel %vm296, %v233, 0
        %v579 = vsel %vm296, %v234, 0
        %v582 = vsel %vm296, %v235, 0
        %v585 = vsel %vm296, %v236, 0
        %v588 = vsel %vm321, %v562, 0
        %590 = vmatprep.subr.mxu0 0.0
        %591 = vmatpush1.msra.mxu0 0.0
        %592 = vmatprep.subr.mxu0 0.0
        %593 = vmatpush1.msra.mxu0 0.0
        %594 = vmatprep.subr.mxu0 0.0
        %595 = vmatpush1.msra.mxu0 0.0
        %596 = vmatprep.subr.mxu0 0.0
        %597 = vmatpush1.msra.mxu0 0.0
        %598 = vmatprep.subr.mxu0 0.0
        %599 = vmatpush1.msra.mxu0 0.0
        %600 = vmatprep.subr.mxu0 0.0
        %601 = vmatpush1.msra.mxu0 0.0
        %602 = vmatprep.subr.mxu0 0.0
        %603 = vmatpush1.msra.mxu0 0.0
        %604 = vmatprep.subr.mxu0 0.0
        %605 = vmatpush1.msra.mxu0 0.0
        %606 = vmatprep.subr.mxu0 0.0
        %607 = vmatpush1.msra.mxu0 0.0
        %608 = vmatprep.subr.mxu0 0.0
        %609 = vmatpush1.msra.mxu0 0.0
        %610 = vmatprep.subr.mxu0 0.0
        %611 = vmatpush1.msra.mxu0 0.0
        %612 = vmatprep.subr.mxu0 0.0
        %613 = vmatpush1.msra.mxu0 0.0
        %614 = vmatprep.subr.mxu0 0.0
        %615 = vmatpush1.msra.mxu0 0.0
        %616 = vmatprep.subr.mxu0 0.0
        %617 = vmatpush1.msra.mxu0 0.0
        %618 = vmatprep.subr.mxu0 0.0
        %619 = vmatpush1.msra.mxu0 0.0
        %620 = vmatprep.subr.mxu0 0.0
        %621 = vmatpush1.msra.mxu0 %v588
        %622 = vmatprep.subr.mxu0 0.0
        %623 = vmatpush2.msra.mxu0 0.0
        %624 = vmatprep.subr.mxu0 0.0
        %625 = vmatpush2.msra.mxu0 0.0
        %626 = vmatprep.subr.mxu0 0.0
        %627 = vmatpush2.msra.mxu0 0.0
        %628 = vmatprep.subr.mxu0 0.0
        %629 = vmatpush2.msra.mxu0 0.0
        %630 = vmatprep.subr.mxu0 0.0
        %631 = vmatpush2.msra.mxu0 0.0
        %632 = vmatprep.subr.mxu0 0.0
        %633 = vmatpush2.msra.mxu0 0.0
        %634 = vmatprep.subr.mxu0 0.0
        %635 = vmatpush2.msra.mxu0 0.0
        %636 = vmatprep.subr.mxu0 0.0
        %637 = vmatpush2.msra.mxu0 0.0
        %638 = vmatprep.subr.mxu0 0.0
        %639 = vmatpush2.msra.mxu0 0.0
        %640 = vmatprep.subr.mxu0 0.0
        %641 = vmatpush2.msra.mxu0 0.0
        %642 = vmatprep.subr.mxu0 0.0
        %643 = vmatpush2.msra.mxu0 0.0
        %644 = vmatprep.subr.mxu0 0.0
        %645 = vmatpush2.msra.mxu0 0.0
        %646 = vmatprep.subr.mxu0 0.0
        %647 = vmatpush2.msra.mxu0 0.0
        %648 = vmatprep.subr.mxu0 0.0
        %649 = vmatpush2.msra.mxu0 0.0
        %650 = vmatprep.subr.mxu0 0.0
        %651 = vmatpush2.msra.mxu0 0.0
        %652 = vmatprep.subr.mxu0 0.0
        %653 = vmatpush2.msra.mxu0 0.0
        %654 = vmatprep.mubr.f32.mxu0 0.0
        %655 = vmatmul.mubr.f32.gmra.mxu0 %v564
        %v656 = vpop.f32.mrf.mxu0
        %v657 = vadd.f32 0.0, %v656
        %v658 = vpop.f32.mrf.mxu0
        %659 = vmatprep.mubr.f32.mxu0 0.0
        %660 = vmatmul.mubr.f32.gmra.mxu0 %v567
        %v661 = vpop.f32.mrf.mxu0
        %v662 = vadd.f32 0.0, %v661
        %v663 = vpop.f32.mrf.mxu0
        %664 = vmatprep.mubr.f32.mxu0 0.0
        %665 = vmatmul.mubr.f32.gmra.mxu0 %v570
        %v666 = vpop.f32.mrf.mxu0
        %v667 = vadd.f32 0.0, %v666
        %v668 = vpop.f32.mrf.mxu0
        %669 = vmatprep.mubr.f32.mxu0 0.0
        %670 = vmatmul.mubr.f32.gmra.mxu0 %v573
        %v671 = vpop.f32.mrf.mxu0
        %v672 = vadd.f32 0.0, %v671
        %v673 = vpop.f32.mrf.mxu0
        %674 = vmatprep.mubr.f32.mxu0 0.0
        %675 = vmatmul.mubr.f32.gmra.mxu0 %v576
        %v676 = vpop.f32.mrf.mxu0
        %v677 = vadd.f32 0.0, %v676
        %v678 = vpop.f32.mrf.mxu0
        %679 = vmatprep.mubr.f32.mxu0 0.0
        %680 = vmatmul.mubr.f32.gmra.mxu0 %v579
        %v681 = vpop.f32.mrf.mxu0
        %v682 = vadd.f32 0.0, %v681
        %v683 = vpop.f32.mrf.mxu0
        %684 = vmatprep.mubr.f32.mxu0 0.0
        %685 = vmatmul.mubr.f32.gmra.mxu0 %v582
        %v686 = vpop.f32.mrf.mxu0
        %v687 = vadd.f32 0.0, %v686
        %v688 = vpop.f32.mrf.mxu0
        %689 = vmatprep.mubr.f32.mxu0 0.0
        %690 = vmatmul.mubr.f32.gmra.mxu0 %v585
        %v691 = vpop.f32.mrf.mxu0
        %v692 = vadd.f32 0.0, %v691
        %v693 = vpop.f32.mrf.mxu0
        %694 = vdwg.mxu0
        %v695 = vadd.f32 %v524, %v657
        %v696 = vadd.f32 %v529, %v662
        %v697 = vadd.f32 %v534, %v667
        %v698 = vadd.f32 %v539, %v672
        %v699 = vadd.f32 %v544, %v677
        %v700 = vadd.f32 %v549, %v682
        %v701 = vadd.f32 %v554, %v687
        %v702 = vadd.f32 %v559, %v692
        %v703 = vld [vmem:[%s1 + $0xc] sm:$0xf]
        %v705 = vsel %vm296, %v239, 0
        %v708 = vsel %vm296, %v240, 0
        %v711 = vsel %vm296, %v241, 0
        %v714 = vsel %vm296, %v242, 0
        %v717 = vsel %vm296, %v243, 0
        %v720 = vsel %vm296, %v244, 0
        %v723 = vsel %vm296, %v245, 0
        %v726 = vsel %vm296, %v246, 0
        %v729 = vsel %vm321, %v703, 0
        %731 = vmatprep.subr.mxu0 0.0
        %732 = vmatpush1.msra.mxu0 0.0
        %733 = vmatprep.subr.mxu0 0.0
        %734 = vmatpush1.msra.mxu0 0.0
        %735 = vmatprep.subr.mxu0 0.0
        %736 = vmatpush1.msra.mxu0 0.0
        %737 = vmatprep.subr.mxu0 0.0
        %738 = vmatpush1.msra.mxu0 0.0
        %739 = vmatprep.subr.mxu0 0.0
        %740 = vmatpush1.msra.mxu0 0.0
        %741 = vmatprep.subr.mxu0 0.0
        %742 = vmatpush1.msra.mxu0 0.0
        %743 = vmatprep.subr.mxu0 0.0
        %744 = vmatpush1.msra.mxu0 0.0
        %745 = vmatprep.subr.mxu0 0.0
        %746 = vmatpush1.msra.mxu0 0.0
        %747 = vmatprep.subr.mxu0 0.0
        %748 = vmatpush1.msra.mxu0 0.0
        %749 = vmatprep.subr.mxu0 0.0
        %750 = vmatpush1.msra.mxu0 0.0
        %751 = vmatprep.subr.mxu0 0.0
        %752 = vmatpush1.msra.mxu0 0.0
        %753 = vmatprep.subr.mxu0 0.0
        %754 = vmatpush1.msra.mxu0 0.0
        %755 = vmatprep.subr.mxu0 0.0
        %756 = vmatpush1.msra.mxu0 0.0
        %757 = vmatprep.subr.mxu0 0.0
        %758 = vmatpush1.msra.mxu0 0.0
        %759 = vmatprep.subr.mxu0 0.0
        %760 = vmatpush1.msra.mxu0 0.0
        %761 = vmatprep.subr.mxu0 0.0
        %762 = vmatpush1.msra.mxu0 %v729
        %763 = vmatprep.subr.mxu0 0.0
        %764 = vmatpush2.msra.mxu0 0.0
        %765 = vmatprep.subr.mxu0 0.0
        %766 = vmatpush2.msra.mxu0 0.0
        %767 = vmatprep.subr.mxu0 0.0
        %768 = vmatpush2.msra.mxu0 0.0
        %769 = vmatprep.subr.mxu0 0.0
        %770 = vmatpush2.msra.mxu0 0.0
        %771 = vmatprep.subr.mxu0 0.0
        %772 = vmatpush2.msra.mxu0 0.0
        %773 = vmatprep.subr.mxu0 0.0
        %774 = vmatpush2.msra.mxu0 0.0
        %775 = vmatprep.subr.mxu0 0.0
        %776 = vmatpush2.msra.mxu0 0.0
        %777 = vmatprep.subr.mxu0 0.0
        %778 = vmatpush2.msra.mxu0 0.0
        %779 = vmatprep.subr.mxu0 0.0
        %780 = vmatpush2.msra.mxu0 0.0
        %781 = vmatprep.subr.mxu0 0.0
        %782 = vmatpush2.msra.mxu0 0.0
        %783 = vmatprep.subr.mxu0 0.0
        %784 = vmatpush2.msra.mxu0 0.0
        %785 = vmatprep.subr.mxu0 0.0
        %786 = vmatpush2.msra.mxu0 0.0
        %787 = vmatprep.subr.mxu0 0.0
        %788 = vmatpush2.msra.mxu0 0.0
        %789 = vmatprep.subr.mxu0 0.0
        %790 = vmatpush2.msra.mxu0 0.0
        %791 = vmatprep.subr.mxu0 0.0
        %792 = vmatpush2.msra.mxu0 0.0
        %793 = vmatprep.subr.mxu0 0.0
        %794 = vmatpush2.msra.mxu0 0.0
        %795 = vmatprep.mubr.f32.mxu0 0.0
        %796 = vmatmul.mubr.f32.gmra.mxu0 %v705
        %v797 = vpop.f32.mrf.mxu0
        %v798 = vadd.f32 0.0, %v797
        %v799 = vpop.f32.mrf.mxu0
        %800 = vmatprep.mubr.f32.mxu0 0.0
        %801 = vmatmul.mubr.f32.gmra.mxu0 %v708
        %v802 = vpop.f32.mrf.mxu0
        %v803 = vadd.f32 0.0, %v802
        %v804 = vpop.f32.mrf.mxu0
        %805 = vmatprep.mubr.f32.mxu0 0.0
        %806 = vmatmul.mubr.f32.gmra.mxu0 %v711
        %v807 = vpop.f32.mrf.mxu0
        %v808 = vadd.f32 0.0, %v807
        %v809 = vpop.f32.mrf.mxu0
        %810 = vmatprep.mubr.f32.mxu0 0.0
        %811 = vmatmul.mubr.f32.gmra.mxu0 %v714
        %v812 = vpop.f32.mrf.mxu0
        %v813 = vadd.f32 0.0, %v812
        %v814 = vpop.f32.mrf.mxu0
        %815 = vmatprep.mubr.f32.mxu0 0.0
        %816 = vmatmul.mubr.f32.gmra.mxu0 %v717
        %v817 = vpop.f32.mrf.mxu0
        %v818 = vadd.f32 0.0, %v817
        %v819 = vpop.f32.mrf.mxu0
        %820 = vmatprep.mubr.f32.mxu0 0.0
        %821 = vmatmul.mubr.f32.gmra.mxu0 %v720
        %v822 = vpop.f32.mrf.mxu0
        %v823 = vadd.f32 0.0, %v822
        %v824 = vpop.f32.mrf.mxu0
        %825 = vmatprep.mubr.f32.mxu0 0.0
        %826 = vmatmul.mubr.f32.gmra.mxu0 %v723
        %v827 = vpop.f32.mrf.mxu0
        %v828 = vadd.f32 0.0, %v827
        %v829 = vpop.f32.mrf.mxu0
        %830 = vmatprep.mubr.f32.mxu0 0.0
        %831 = vmatmul.mubr.f32.gmra.mxu0 %v726
        %v832 = vpop.f32.mrf.mxu0
        %v833 = vadd.f32 0.0, %v832
        %v834 = vpop.f32.mrf.mxu0
        %835 = vdwg.mxu0
        %v836 = vadd.f32 %v695, %v798
        %v837 = vadd.f32 %v696, %v803
        %v838 = vadd.f32 %v697, %v808
        %v839 = vadd.f32 %v698, %v813
        %v840 = vadd.f32 %v699, %v818
        %v841 = vadd.f32 %v700, %v823
        %v842 = vadd.f32 %v701, %v828
        %v843 = vadd.f32 %v702, %v833
        %v844 = vld [vmem:[%s1 + $0x10] sm:$0xf]
        %v846 = vsel %vm296, %v249, 0
        %v849 = vsel %vm296, %v250, 0
        %v852 = vsel %vm296, %v251, 0
        %v855 = vsel %vm296, %v252, 0
        %v858 = vsel %vm296, %v253, 0
        %v861 = vsel %vm296, %v254, 0
        %v864 = vsel %vm296, %v255, 0
        %v867 = vsel %vm296, %v256, 0
        %v870 = vsel %vm321, %v844, 0
        %872 = vmatprep.subr.mxu0 0.0
        %873 = vmatpush1.msra.mxu0 0.0
        %874 = vmatprep.subr.mxu0 0.0
        %875 = vmatpush1.msra.mxu0 0.0
        %876 = vmatprep.subr.mxu0 0.0
        %877 = vmatpush1.msra.mxu0 0.0
        %878 = vmatprep.subr.mxu0 0.0
        %879 = vmatpush1.msra.mxu0 0.0
        %880 = vmatprep.subr.mxu0 0.0
        %881 = vmatpush1.msra.mxu0 0.0
        %882 = vmatprep.subr.mxu0 0.0
        %883 = vmatpush1.msra.mxu0 0.0
        %884 = vmatprep.subr.mxu0 0.0
        %885 = vmatpush1.msra.mxu0 0.0
        %886 = vmatprep.subr.mxu0 0.0
        %887 = vmatpush1.msra.mxu0 0.0
        %888 = vmatprep.subr.mxu0 0.0
        %889 = vmatpush1.msra.mxu0 0.0
        %890 = vmatprep.subr.mxu0 0.0
        %891 = vmatpush1.msra.mxu0 0.0
        %892 = vmatprep.subr.mxu0 0.0
        %893 = vmatpush1.msra.mxu0 0.0
        %894 = vmatprep.subr.mxu0 0.0
        %895 = vmatpush1.msra.mxu0 0.0
        %896 = vmatprep.subr.mxu0 0.0
        %897 = vmatpush1.msra.mxu0 0.0
        %898 = vmatprep.subr.mxu0 0.0
        %899 = vmatpush1.msra.mxu0 0.0
        %900 = vmatprep.subr.mxu0 0.0
        %901 = vmatpush1.msra.mxu0 0.0
        %902 = vmatprep.subr.mxu0 0.0
        %903 = vmatpush1.msra.mxu0 %v870
        %904 = vmatprep.subr.mxu0 0.0
        %905 = vmatpush2.msra.mxu0 0.0
        %906 = vmatprep.subr.mxu0 0.0
        %907 = vmatpush2.msra.mxu0 0.0
        %908 = vmatprep.subr.mxu0 0.0
        %909 = vmatpush2.msra.mxu0 0.0
        %910 = vmatprep.subr.mxu0 0.0
        %911 = vmatpush2.msra.mxu0 0.0
        %912 = vmatprep.subr.mxu0 0.0
        %913 = vmatpush2.msra.mxu0 0.0
        %914 = vmatprep.subr.mxu0 0.0
        %915 = vmatpush2.msra.mxu0 0.0
        %916 = vmatprep.subr.mxu0 0.0
        %917 = vmatpush2.msra.mxu0 0.0
        %918 = vmatprep.subr.mxu0 0.0
        %919 = vmatpush2.msra.mxu0 0.0
        %920 = vmatprep.subr.mxu0 0.0
        %921 = vmatpush2.msra.mxu0 0.0
        %922 = vmatprep.subr.mxu0 0.0
        %923 = vmatpush2.msra.mxu0 0.0
        %924 = vmatprep.subr.mxu0 0.0
        %925 = vmatpush2.msra.mxu0 0.0
        %926 = vmatprep.subr.mxu0 0.0
        %927 = vmatpush2.msra.mxu0 0.0
        %928 = vmatprep.subr.mxu0 0.0
        %929 = vmatpush2.msra.mxu0 0.0
        %930 = vmatprep.subr.mxu0 0.0
        %931 = vmatpush2.msra.mxu0 0.0
        %932 = vmatprep.subr.mxu0 0.0
        %933 = vmatpush2.msra.mxu0 0.0
        %934 = vmatprep.subr.mxu0 0.0
        %935 = vmatpush2.msra.mxu0 0.0
        %936 = vmatprep.mubr.f32.mxu0 0.0
        %937 = vmatmul.mubr.f32.gmra.mxu0 %v846
        %v938 = vpop.f32.mrf.mxu0
        %v939 = vadd.f32 0.0, %v938
        %v940 = vpop.f32.mrf.mxu0
        %941 = vmatprep.mubr.f32.mxu0 0.0
        %942 = vmatmul.mubr.f32.gmra.mxu0 %v849
        %v943 = vpop.f32.mrf.mxu0
        %v944 = vadd.f32 0.0, %v943
        %v945 = vpop.f32.mrf.mxu0
        %946 = vmatprep.mubr.f32.mxu0 0.0
        %947 = vmatmul.mubr.f32.gmra.mxu0 %v852
        %v948 = vpop.f32.mrf.mxu0
        %v949 = vadd.f32 0.0, %v948
        %v950 = vpop.f32.mrf.mxu0
        %951 = vmatprep.mubr.f32.mxu0 0.0
        %952 = vmatmul.mubr.f32.gmra.mxu0 %v855
        %v953 = vpop.f32.mrf.mxu0
        %v954 = vadd.f32 0.0, %v953
        %v955 = vpop.f32.mrf.mxu0
        %956 = vmatprep.mubr.f32.mxu0 0.0
        %957 = vmatmul.mubr.f32.gmra.mxu0 %v858
        %v958 = vpop.f32.mrf.mxu0
        %v959 = vadd.f32 0.0, %v958
        %v960 = vpop.f32.mrf.mxu0
        %961 = vmatprep.mubr.f32.mxu0 0.0
        %962 = vmatmul.mubr.f32.gmra.mxu0 %v861
        %v963 = vpop.f32.mrf.mxu0
        %v964 = vadd.f32 0.0, %v963
        %v965 = vpop.f32.mrf.mxu0
        %966 = vmatprep.mubr.f32.mxu0 0.0
        %967 = vmatmul.mubr.f32.gmra.mxu0 %v864
        %v968 = vpop.f32.mrf.mxu0
        %v969 = vadd.f32 0.0, %v968
        %v970 = vpop.f32.mrf.mxu0
        %971 = vmatprep.mubr.f32.mxu0 0.0
        %972 = vmatmul.mubr.f32.gmra.mxu0 %v867
        %v973 = vpop.f32.mrf.mxu0
        %v974 = vadd.f32 0.0, %v973
        %v975 = vpop.f32.mrf.mxu0
        %976 = vdwg.mxu0
        %v977 = vadd.f32 %v836, %v939
        %v978 = vadd.f32 %v837, %v944
        %v979 = vadd.f32 %v838, %v949
        %v980 = vadd.f32 %v839, %v954
        %v981 = vadd.f32 %v840, %v959
        %v982 = vadd.f32 %v841, %v964
        %v983 = vadd.f32 %v842, %v969
        %v984 = vadd.f32 %v843, %v974
        %v985 = vld [vmem:[%s1 + $0x14] sm:$0xf]
        %v987 = vsel %vm296, %v257, 0
        %v990 = vsel %vm296, %v258, 0
        %v993 = vsel %vm296, %v259, 0
        %v996 = vsel %vm296, %v260, 0
        %v999 = vsel %vm296, %v261, 0
        %v1002 = vsel %vm296, %v262, 0
        %v1005 = vsel %vm296, %v263, 0
        %v1008 = vsel %vm296, %v264, 0
        %v1011 = vsel %vm321, %v985, 0
        %1013 = vmatprep.subr.mxu0 0.0
        %1014 = vmatpush1.msra.mxu0 0.0
        %1015 = vmatprep.subr.mxu0 0.0
        %1016 = vmatpush1.msra.mxu0 0.0
        %1017 = vmatprep.subr.mxu0 0.0
        %1018 = vmatpush1.msra.mxu0 0.0
        %1019 = vmatprep.subr.mxu0 0.0
        %1020 = vmatpush1.msra.mxu0 0.0
        %1021 = vmatprep.subr.mxu0 0.0
        %1022 = vmatpush1.msra.mxu0 0.0
        %1023 = vmatprep.subr.mxu0 0.0
        %1024 = vmatpush1.msra.mxu0 0.0
        %1025 = vmatprep.subr.mxu0 0.0
        %1026 = vmatpush1.msra.mxu0 0.0
        %1027 = vmatprep.subr.mxu0 0.0
        %1028 = vmatpush1.msra.mxu0 0.0
        %1029 = vmatprep.subr.mxu0 0.0
        %1030 = vmatpush1.msra.mxu0 0.0
        %1031 = vmatprep.subr.mxu0 0.0
        %1032 = vmatpush1.msra.mxu0 0.0
        %1033 = vmatprep.subr.mxu0 0.0
        %1034 = vmatpush1.msra.mxu0 0.0
        %1035 = vmatprep.subr.mxu0 0.0
        %1036 = vmatpush1.msra.mxu0 0.0
        %1037 = vmatprep.subr.mxu0 0.0
        %1038 = vmatpush1.msra.mxu0 0.0
        %1039 = vmatprep.subr.mxu0 0.0
        %1040 = vmatpush1.msra.mxu0 0.0
        %1041 = vmatprep.subr.mxu0 0.0
        %1042 = vmatpush1.msra.mxu0 0.0
        %1043 = vmatprep.subr.mxu0 0.0
        %1044 = vmatpush1.msra.mxu0 %v1011
        %1045 = vmatprep.subr.mxu0 0.0
        %1046 = vmatpush2.msra.mxu0 0.0
        %1047 = vmatprep.subr.mxu0 0.0
        %1048 = vmatpush2.msra.mxu0 0.0
        %1049 = vmatprep.subr.mxu0 0.0
        %1050 = vmatpush2.msra.mxu0 0.0
        %1051 = vmatprep.subr.mxu0 0.0
        %1052 = vmatpush2.msra.mxu0 0.0
        %1053 = vmatprep.subr.mxu0 0.0
        %1054 = vmatpush2.msra.mxu0 0.0
        %1055 = vmatprep.subr.mxu0 0.0
        %1056 = vmatpush2.msra.mxu0 0.0
        %1057 = vmatprep.subr.mxu0 0.0
        %1058 = vmatpush2.msra.mxu0 0.0
        %1059 = vmatprep.subr.mxu0 0.0
        %1060 = vmatpush2.msra.mxu0 0.0
        %1061 = vmatprep.subr.mxu0 0.0
        %1062 = vmatpush2.msra.mxu0 0.0
        %1063 = vmatprep.subr.mxu0 0.0
        %1064 = vmatpush2.msra.mxu0 0.0
        %1065 = vmatprep.subr.mxu0 0.0
        %1066 = vmatpush2.msra.mxu0 0.0
        %1067 = vmatprep.subr.mxu0 0.0
        %1068 = vmatpush2.msra.mxu0 0.0
        %1069 = vmatprep.subr.mxu0 0.0
        %1070 = vmatpush2.msra.mxu0 0.0
        %1071 = vmatprep.subr.mxu0 0.0
        %1072 = vmatpush2.msra.mxu0 0.0
        %1073 = vmatprep.subr.mxu0 0.0
        %1074 = vmatpush2.msra.mxu0 0.0
        %1075 = vmatprep.subr.mxu0 0.0
        %1076 = vmatpush2.msra.mxu0 0.0
        %1077 = vmatprep.mubr.f32.mxu0 0.0
        %1078 = vmatmul.mubr.f32.gmra.mxu0 %v987
        %v1079 = vpop.f32.mrf.mxu0
        %v1080 = vadd.f32 0.0, %v1079
        %v1081 = vpop.f32.mrf.mxu0
        %1082 = vmatprep.mubr.f32.mxu0 0.0
        %1083 = vmatmul.mubr.f32.gmra.mxu0 %v990
        %v1084 = vpop.f32.mrf.mxu0
        %v1085 = vadd.f32 0.0, %v1084
        %v1086 = vpop.f32.mrf.mxu0
        %1087 = vmatprep.mubr.f32.mxu0 0.0
        %1088 = vmatmul.mubr.f32.gmra.mxu0 %v993
        %v1089 = vpop.f32.mrf.mxu0
        %v1090 = vadd.f32 0.0, %v1089
        %v1091 = vpop.f32.mrf.mxu0
        %1092 = vmatprep.mubr.f32.mxu0 0.0
        %1093 = vmatmul.mubr.f32.gmra.mxu0 %v996
        %v1094 = vpop.f32.mrf.mxu0
        %v1095 = vadd.f32 0.0, %v1094
        %v1096 = vpop.f32.mrf.mxu0
        %1097 = vmatprep.mubr.f32.mxu0 0.0
        %1098 = vmatmul.mubr.f32.gmra.mxu0 %v999
        %v1099 = vpop.f32.mrf.mxu0
        %v1100 = vadd.f32 0.0, %v1099
        %v1101 = vpop.f32.mrf.mxu0
        %1102 = vmatprep.mubr.f32.mxu0 0.0
        %1103 = vmatmul.mubr.f32.gmra.mxu0 %v1002
        %v1104 = vpop.f32.mrf.mxu0
        %v1105 = vadd.f32 0.0, %v1104
        %v1106 = vpop.f32.mrf.mxu0
        %1107 = vmatprep.mubr.f32.mxu0 0.0
        %1108 = vmatmul.mubr.f32.gmra.mxu0 %v1005
        %v1109 = vpop.f32.mrf.mxu0
        %v1110 = vadd.f32 0.0, %v1109
        %v1111 = vpop.f32.mrf.mxu0
        %1112 = vmatprep.mubr.f32.mxu0 0.0
        %1113 = vmatmul.mubr.f32.gmra.mxu0 %v1008
        %v1114 = vpop.f32.mrf.mxu0
        %v1115 = vadd.f32 0.0, %v1114
        %v1116 = vpop.f32.mrf.mxu0
        %1117 = vdwg.mxu0
        %v1118 = vadd.f32 %v977, %v1080
        %v1119 = vadd.f32 %v978, %v1085
        %v1120 = vadd.f32 %v979, %v1090
        %v1121 = vadd.f32 %v980, %v1095
        %v1122 = vadd.f32 %v981, %v1100
        %v1123 = vadd.f32 %v982, %v1105
        %v1124 = vadd.f32 %v983, %v1110
        %v1125 = vadd.f32 %v984, %v1115
        %v1126 = vld [vmem:[%s1 + $0x18] sm:$0xf]
        %v1128 = vsel %vm296, %v268, 0
        %v1131 = vsel %vm296, %v269, 0
        %v1134 = vsel %vm296, %v270, 0
        %v1137 = vsel %vm296, %v271, 0
        %v1140 = vsel %vm296, %v272, 0
        %v1143 = vsel %vm296, %v273, 0
        %v1146 = vsel %vm296, %v274, 0
        %v1149 = vsel %vm296, %v275, 0
        %v1152 = vsel %vm321, %v1126, 0
        %1154 = vmatprep.subr.mxu0 0.0
        %1155 = vmatpush1.msra.mxu0 0.0
        %1156 = vmatprep.subr.mxu0 0.0
        %1157 = vmatpush1.msra.mxu0 0.0
        %1158 = vmatprep.subr.mxu0 0.0
        %1159 = vmatpush1.msra.mxu0 0.0
        %1160 = vmatprep.subr.mxu0 0.0
        %1161 = vmatpush1.msra.mxu0 0.0
        %1162 = vmatprep.subr.mxu0 0.0
        %1163 = vmatpush1.msra.mxu0 0.0
        %1164 = vmatprep.subr.mxu0 0.0
        %1165 = vmatpush1.msra.mxu0 0.0
        %1166 = vmatprep.subr.mxu0 0.0
        %1167 = vmatpush1.msra.mxu0 0.0
        %1168 = vmatprep.subr.mxu0 0.0
        %1169 = vmatpush1.msra.mxu0 0.0
        %1170 = vmatprep.subr.mxu0 0.0
        %1171 = vmatpush1.msra.mxu0 0.0
        %1172 = vmatprep.subr.mxu0 0.0
        %1173 = vmatpush1.msra.mxu0 0.0
        %1174 = vmatprep.subr.mxu0 0.0
        %1175 = vmatpush1.msra.mxu0 0.0
        %1176 = vmatprep.subr.mxu0 0.0
        %1177 = vmatpush1.msra.mxu0 0.0
        %1178 = vmatprep.subr.mxu0 0.0
        %1179 = vmatpush1.msra.mxu0 0.0
        %1180 = vmatprep.subr.mxu0 0.0
        %1181 = vmatpush1.msra.mxu0 0.0
        %1182 = vmatprep.subr.mxu0 0.0
        %1183 = vmatpush1.msra.mxu0 0.0
        %1184 = vmatprep.subr.mxu0 0.0
        %1185 = vmatpush1.msra.mxu0 %v1152
        %1186 = vmatprep.subr.mxu0 0.0
        %1187 = vmatpush2.msra.mxu0 0.0
        %1188 = vmatprep.subr.mxu0 0.0
        %1189 = vmatpush2.msra.mxu0 0.0
        %1190 = vmatprep.subr.mxu0 0.0
        %1191 = vmatpush2.msra.mxu0 0.0
        %1192 = vmatprep.subr.mxu0 0.0
        %1193 = vmatpush2.msra.mxu0 0.0
        %1194 = vmatprep.subr.mxu0 0.0
        %1195 = vmatpush2.msra.mxu0 0.0
        %1196 = vmatprep.subr.mxu0 0.0
        %1197 = vmatpush2.msra.mxu0 0.0
        %1198 = vmatprep.subr.mxu0 0.0
        %1199 = vmatpush2.msra.mxu0 0.0
        %1200 = vmatprep.subr.mxu0 0.0
        %1201 = vmatpush2.msra.mxu0 0.0
        %1202 = vmatprep.subr.mxu0 0.0
        %1203 = vmatpush2.msra.mxu0 0.0
        %1204 = vmatprep.subr.mxu0 0.0
        %1205 = vmatpush2.msra.mxu0 0.0
        %1206 = vmatprep.subr.mxu0 0.0
        %1207 = vmatpush2.msra.mxu0 0.0
        %1208 = vmatprep.subr.mxu0 0.0
        %1209 = vmatpush2.msra.mxu0 0.0
        %1210 = vmatprep.subr.mxu0 0.0
        %1211 = vmatpush2.msra.mxu0 0.0
        %1212 = vmatprep.subr.mxu0 0.0
        %1213 = vmatpush2.msra.mxu0 0.0
        %1214 = vmatprep.subr.mxu0 0.0
        %1215 = vmatpush2.msra.mxu0 0.0
        %1216 = vmatprep.subr.mxu0 0.0
        %1217 = vmatpush2.msra.mxu0 0.0
        %1218 = vmatprep.mubr.f32.mxu0 0.0
        %1219 = vmatmul.mubr.f32.gmra.mxu0 %v1128
        %v1220 = vpop.f32.mrf.mxu0
        %v1221 = vadd.f32 0.0, %v1220
        %v1222 = vpop.f32.mrf.mxu0
        %1223 = vmatprep.mubr.f32.mxu0 0.0
        %1224 = vmatmul.mubr.f32.gmra.mxu0 %v1131
        %v1225 = vpop.f32.mrf.mxu0
        %v1226 = vadd.f32 0.0, %v1225
        %v1227 = vpop.f32.mrf.mxu0
        %1228 = vmatprep.mubr.f32.mxu0 0.0
        %1229 = vmatmul.mubr.f32.gmra.mxu0 %v1134
        %v1230 = vpop.f32.mrf.mxu0
        %v1231 = vadd.f32 0.0, %v1230
        %v1232 = vpop.f32.mrf.mxu0
        %1233 = vmatprep.mubr.f32.mxu0 0.0
        %1234 = vmatmul.mubr.f32.gmra.mxu0 %v1137
        %v1235 = vpop.f32.mrf.mxu0
        %v1236 = vadd.f32 0.0, %v1235
        %v1237 = vpop.f32.mrf.mxu0
        %1238 = vmatprep.mubr.f32.mxu0 0.0
        %1239 = vmatmul.mubr.f32.gmra.mxu0 %v1140
        %v1240 = vpop.f32.mrf.mxu0
        %v1241 = vadd.f32 0.0, %v1240
        %v1242 = vpop.f32.mrf.mxu0
        %1243 = vmatprep.mubr.f32.mxu0 0.0
        %1244 = vmatmul.mubr.f32.gmra.mxu0 %v1143
        %v1245 = vpop.f32.mrf.mxu0
        %v1246 = vadd.f32 0.0, %v1245
        %v1247 = vpop.f32.mrf.mxu0
        %1248 = vmatprep.mubr.f32.mxu0 0.0
        %1249 = vmatmul.mubr.f32.gmra.mxu0 %v1146
        %v1250 = vpop.f32.mrf.mxu0
        %v1251 = vadd.f32 0.0, %v1250
        %v1252 = vpop.f32.mrf.mxu0
        %1253 = vmatprep.mubr.f32.mxu0 0.0
        %1254 = vmatmul.mubr.f32.gmra.mxu0 %v1149
        %v1255 = vpop.f32.mrf.mxu0
        %v1256 = vadd.f32 0.0, %v1255
        %v1257 = vpop.f32.mrf.mxu0
        %1258 = vdwg.mxu0
        %v1259 = vadd.f32 %v1118, %v1221
        %v1260 = vadd.f32 %v1119, %v1226
        %v1261 = vadd.f32 %v1120, %v1231
        %v1262 = vadd.f32 %v1121, %v1236
        %v1263 = vadd.f32 %v1122, %v1241
        %v1264 = vadd.f32 %v1123, %v1246
        %v1265 = vadd.f32 %v1124, %v1251
        %v1266 = vadd.f32 %v1125, %v1256
        %v1267 = vld [vmem:[%s1 + $0x1c] sm:$0xf]
        %v1269 = vsel %vm296, %v278, 0
        %v1272 = vsel %vm296, %v279, 0
        %v1275 = vsel %vm296, %v280, 0
        %v1278 = vsel %vm296, %v281, 0
        %v1281 = vsel %vm296, %v282, 0
        %v1284 = vsel %vm296, %v283, 0
        %v1287 = vsel %vm296, %v284, 0
        %v1290 = vsel %vm296, %v285, 0
        %v1293 = vsel %vm321, %v1267, 0
        %1295 = vmatprep.subr.mxu0 0.0
        %1296 = vmatpush1.msra.mxu0 0.0
        %1297 = vmatprep.subr.mxu0 0.0
        %1298 = vmatpush1.msra.mxu0 0.0
        %1299 = vmatprep.subr.mxu0 0.0
        %1300 = vmatpush1.msra.mxu0 0.0
        %1301 = vmatprep.subr.mxu0 0.0
        %1302 = vmatpush1.msra.mxu0 0.0
        %1303 = vmatprep.subr.mxu0 0.0
        %1304 = vmatpush1.msra.mxu0 0.0
        %1305 = vmatprep.subr.mxu0 0.0
        %1306 = vmatpush1.msra.mxu0 0.0
        %1307 = vmatprep.subr.mxu0 0.0
        %1308 = vmatpush1.msra.mxu0 0.0
        %1309 = vmatprep.subr.mxu0 0.0
        %1310 = vmatpush1.msra.mxu0 0.0
        %1311 = vmatprep.subr.mxu0 0.0
        %1312 = vmatpush1.msra.mxu0 0.0
        %1313 = vmatprep.subr.mxu0 0.0
        %1314 = vmatpush1.msra.mxu0 0.0
        %1315 = vmatprep.subr.mxu0 0.0
        %1316 = vmatpush1.msra.mxu0 0.0
        %1317 = vmatprep.subr.mxu0 0.0
        %1318 = vmatpush1.msra.mxu0 0.0
        %1319 = vmatprep.subr.mxu0 0.0
        %1320 = vmatpush1.msra.mxu0 0.0
        %1321 = vmatprep.subr.mxu0 0.0
        %1322 = vmatpush1.msra.mxu0 0.0
        %1323 = vmatprep.subr.mxu0 0.0
        %1324 = vmatpush1.msra.mxu0 0.0
        %1325 = vmatprep.subr.mxu0 0.0
        %1326 = vmatpush1.msra.mxu0 %v1293
        %1327 = vmatprep.subr.mxu0 0.0
        %1328 = vmatpush2.msra.mxu0 0.0
        %1329 = vmatprep.subr.mxu0 0.0
        %1330 = vmatpush2.msra.mxu0 0.0
        %1331 = vmatprep.subr.mxu0 0.0
        %1332 = vmatpush2.msra.mxu0 0.0
        %1333 = vmatprep.subr.mxu0 0.0
        %1334 = vmatpush2.msra.mxu0 0.0
        %1335 = vmatprep.subr.mxu0 0.0
        %1336 = vmatpush2.msra.mxu0 0.0
        %1337 = vmatprep.subr.mxu0 0.0
        %1338 = vmatpush2.msra.mxu0 0.0
        %1339 = vmatprep.subr.mxu0 0.0
        %1340 = vmatpush2.msra.mxu0 0.0
        %1341 = vmatprep.subr.mxu0 0.0
        %1342 = vmatpush2.msra.mxu0 0.0
        %1343 = vmatprep.subr.mxu0 0.0
        %1344 = vmatpush2.msra.mxu0 0.0
        %1345 = vmatprep.subr.mxu0 0.0
        %1346 = vmatpush2.msra.mxu0 0.0
        %1347 = vmatprep.subr.mxu0 0.0
        %1348 = vmatpush2.msra.mxu0 0.0
        %1349 = vmatprep.subr.mxu0 0.0
        %1350 = vmatpush2.msra.mxu0 0.0
        %1351 = vmatprep.subr.mxu0 0.0
        %1352 = vmatpush2.msra.mxu0 0.0
        %1353 = vmatprep.subr.mxu0 0.0
        %1354 = vmatpush2.msra.mxu0 0.0
        %1355 = vmatprep.subr.mxu0 0.0
        %1356 = vmatpush2.msra.mxu0 0.0
        %1357 = vmatprep.subr.mxu0 0.0
        %1358 = vmatpush2.msra.mxu0 0.0
        %1359 = vmatprep.mubr.f32.mxu0 0.0
        %1360 = vmatmul.mubr.f32.gmra.mxu0 %v1269
        %v1361 = vpop.f32.mrf.mxu0
        %v1362 = vadd.f32 0.0, %v1361
        %v1363 = vpop.f32.mrf.mxu0
        %1364 = vmatprep.mubr.f32.mxu0 0.0
        %1365 = vmatmul.mubr.f32.gmra.mxu0 %v1272
        %v1366 = vpop.f32.mrf.mxu0
        %v1367 = vadd.f32 0.0, %v1366
        %v1368 = vpop.f32.mrf.mxu0
        %1369 = vmatprep.mubr.f32.mxu0 0.0
        %1370 = vmatmul.mubr.f32.gmra.mxu0 %v1275
        %v1371 = vpop.f32.mrf.mxu0
        %v1372 = vadd.f32 0.0, %v1371
        %v1373 = vpop.f32.mrf.mxu0
        %1374 = vmatprep.mubr.f32.mxu0 0.0
        %1375 = vmatmul.mubr.f32.gmra.mxu0 %v1278
        %v1376 = vpop.f32.mrf.mxu0
        %v1377 = vadd.f32 0.0, %v1376
        %v1378 = vpop.f32.mrf.mxu0
        %1379 = vmatprep.mubr.f32.mxu0 0.0
        %1380 = vmatmul.mubr.f32.gmra.mxu0 %v1281
        %v1381 = vpop.f32.mrf.mxu0
        %v1382 = vadd.f32 0.0, %v1381
        %v1383 = vpop.f32.mrf.mxu0
        %1384 = vmatprep.mubr.f32.mxu0 0.0
        %1385 = vmatmul.mubr.f32.gmra.mxu0 %v1284
        %v1386 = vpop.f32.mrf.mxu0
        %v1387 = vadd.f32 0.0, %v1386
        %v1388 = vpop.f32.mrf.mxu0
        %1389 = vmatprep.mubr.f32.mxu0 0.0
        %1390 = vmatmul.mubr.f32.gmra.mxu0 %v1287
        %v1391 = vpop.f32.mrf.mxu0
        %v1392 = vadd.f32 0.0, %v1391
        %v1393 = vpop.f32.mrf.mxu0
        %1394 = vmatprep.mubr.f32.mxu0 0.0
        %1395 = vmatmul.mubr.f32.gmra.mxu0 %v1290
        %v1396 = vpop.f32.mrf.mxu0
        %v1397 = vadd.f32 0.0, %v1396
        %v1398 = vpop.f32.mrf.mxu0
        %1399 = vdwg.mxu0
        %v1400 = vadd.f32 %v1259, %v1362
        %v1401 = vadd.f32 %v1260, %v1367
        %v1402 = vadd.f32 %v1261, %v1372
        %v1403 = vadd.f32 %v1262, %v1377
        %v1404 = vadd.f32 %v1263, %v1382
        %v1405 = vadd.f32 %v1264, %v1387
        %v1406 = vadd.f32 %v1265, %v1392
        %v1407 = vadd.f32 %v1266, %v1397
        %v1408 = vld [vmem:[%s1 + $0x20] sm:$0xf]
        %v1410 = vsel %vm296, %v286, 0
        %v1413 = vsel %vm296, %v287, 0
        %v1416 = vsel %vm296, %v288, 0
        %v1419 = vsel %vm296, %v289, 0
        %v1422 = vsel %vm296, %v290, 0
        %v1425 = vsel %vm296, %v291, 0
        %v1428 = vsel %vm296, %v292, 0
        %v1431 = vsel %vm296, %v293, 0
        %v1434 = vsel %vm321, %v1408, 0
        %1436 = vmatprep.subr.mxu0 0.0
        %1437 = vmatpush1.msra.mxu0 0.0
        %1438 = vmatprep.subr.mxu0 0.0
        %1439 = vmatpush1.msra.mxu0 0.0
        %1440 = vmatprep.subr.mxu0 0.0
        %1441 = vmatpush1.msra.mxu0 0.0
        %1442 = vmatprep.subr.mxu0 0.0
        %1443 = vmatpush1.msra.mxu0 0.0
        %1444 = vmatprep.subr.mxu0 0.0
        %1445 = vmatpush1.msra.mxu0 0.0
        %1446 = vmatprep.subr.mxu0 0.0
        %1447 = vmatpush1.msra.mxu0 0.0
        %1448 = vmatprep.subr.mxu0 0.0
        %1449 = vmatpush1.msra.mxu0 0.0
        %1450 = vmatprep.subr.mxu0 0.0
        %1451 = vmatpush1.msra.mxu0 0.0
        %1452 = vmatprep.subr.mxu0 0.0
        %1453 = vmatpush1.msra.mxu0 0.0
        %1454 = vmatprep.subr.mxu0 0.0
        %1455 = vmatpush1.msra.mxu0 0.0
        %1456 = vmatprep.subr.mxu0 0.0
        %1457 = vmatpush1.msra.mxu0 0.0
        %1458 = vmatprep.subr.mxu0 0.0
        %1459 = vmatpush1.msra.mxu0 0.0
        %1460 = vmatprep.subr.mxu0 0.0
        %1461 = vmatpush1.msra.mxu0 0.0
        %1462 = vmatprep.subr.mxu0 0.0
        %1463 = vmatpush1.msra.mxu0 0.0
        %1464 = vmatprep.subr.mxu0 0.0
        %1465 = vmatpush1.msra.mxu0 0.0
        %1466 = vmatprep.subr.mxu0 0.0
        %1467 = vmatpush1.msra.mxu0 %v1434
        %1468 = vmatprep.subr.mxu0 0.0
        %1469 = vmatpush2.msra.mxu0 0.0
        %1470 = vmatprep.subr.mxu0 0.0
        %1471 = vmatpush2.msra.mxu0 0.0
        %1472 = vmatprep.subr.mxu0 0.0
        %1473 = vmatpush2.msra.mxu0 0.0
        %1474 = vmatprep.subr.mxu0 0.0
        %1475 = vmatpush2.msra.mxu0 0.0
        %1476 = vmatprep.subr.mxu0 0.0
        %1477 = vmatpush2.msra.mxu0 0.0
        %1478 = vmatprep.subr.mxu0 0.0
        %1479 = vmatpush2.msra.mxu0 0.0
        %1480 = vmatprep.subr.mxu0 0.0
        %1481 = vmatpush2.msra.mxu0 0.0
        %1482 = vmatprep.subr.mxu0 0.0
        %1483 = vmatpush2.msra.mxu0 0.0
        %1484 = vmatprep.subr.mxu0 0.0
        %1485 = vmatpush2.msra.mxu0 0.0
        %1486 = vmatprep.subr.mxu0 0.0
        %1487 = vmatpush2.msra.mxu0 0.0
        %1488 = vmatprep.subr.mxu0 0.0
        %1489 = vmatpush2.msra.mxu0 0.0
        %1490 = vmatprep.subr.mxu0 0.0
        %1491 = vmatpush2.msra.mxu0 0.0
        %1492 = vmatprep.subr.mxu0 0.0
        %1493 = vmatpush2.msra.mxu0 0.0
        %1494 = vmatprep.subr.mxu0 0.0
        %1495 = vmatpush2.msra.mxu0 0.0
        %1496 = vmatprep.subr.mxu0 0.0
        %1497 = vmatpush2.msra.mxu0 0.0
        %1498 = vmatprep.subr.mxu0 0.0
        %1499 = vmatpush2.msra.mxu0 0.0
        %1500 = vmatprep.mubr.f32.mxu0 0.0
        %1501 = vmatmul.mubr.f32.gmra.mxu0 %v1410
        %v1502 = vpop.f32.mrf.mxu0
        %v1503 = vadd.f32 0.0, %v1502
        %v1504 = vpop.f32.mrf.mxu0
        %1505 = vmatprep.mubr.f32.mxu0 0.0
        %1506 = vmatmul.mubr.f32.gmra.mxu0 %v1413
        %v1507 = vpop.f32.mrf.mxu0
        %v1508 = vadd.f32 0.0, %v1507
        %v1509 = vpop.f32.mrf.mxu0
        %1510 = vmatprep.mubr.f32.mxu0 0.0
        %1511 = vmatmul.mubr.f32.gmra.mxu0 %v1416
        %v1512 = vpop.f32.mrf.mxu0
        %v1513 = vadd.f32 0.0, %v1512
        %v1514 = vpop.f32.mrf.mxu0
        %1515 = vmatprep.mubr.f32.mxu0 0.0
        %1516 = vmatmul.mubr.f32.gmra.mxu0 %v1419
        %v1517 = vpop.f32.mrf.mxu0
        %v1518 = vadd.f32 0.0, %v1517
        %v1519 = vpop.f32.mrf.mxu0
        %1520 = vmatprep.mubr.f32.mxu0 0.0
        %1521 = vmatmul.mubr.f32.gmra.mxu0 %v1422
        %v1522 = vpop.f32.mrf.mxu0
        %v1523 = vadd.f32 0.0, %v1522
        %v1524 = vpop.f32.mrf.mxu0
        %1525 = vmatprep.mubr.f32.mxu0 0.0
        %1526 = vmatmul.mubr.f32.gmra.mxu0 %v1425
        %v1527 = vpop.f32.mrf.mxu0
        %v1528 = vadd.f32 0.0, %v1527
        %v1529 = vpop.f32.mrf.mxu0
        %1530 = vmatprep.mubr.f32.mxu0 0.0
        %1531 = vmatmul.mubr.f32.gmra.mxu0 %v1428
        %v1532 = vpop.f32.mrf.mxu0
        %v1533 = vadd.f32 0.0, %v1532
        %v1534 = vpop.f32.mrf.mxu0
        %1535 = vmatprep.mubr.f32.mxu0 0.0
        %1536 = vmatmul.mubr.f32.gmra.mxu0 %v1431
        %v1537 = vpop.f32.mrf.mxu0
        %v1538 = vadd.f32 0.0, %v1537
        %v1539 = vpop.f32.mrf.mxu0
        %1540 = vdwg.mxu0
        %v1541 = vadd.f32 %v1400, %v1503
        %v1542 = vadd.f32 %v1401, %v1508
        %v1543 = vadd.f32 %v1402, %v1513
        %v1544 = vadd.f32 %v1403, %v1518
        %v1545 = vadd.f32 %v1404, %v1523
        %v1546 = vadd.f32 %v1405, %v1528
        %v1547 = vadd.f32 %v1406, %v1533
        %v1548 = vadd.f32 %v1407, %v1538
        %vm1549 = vcmask 64512
        %1550 = vst.msk [vmem:[%s204] sm:$0xff] %vm1549, %v1541
        %1551 = vst.msk [vmem:[%s204 + $0x8] sm:$0xff] %vm1549, %v1542
        %1552 = vst.msk [vmem:[%s204 + $0x10] sm:$0xff] %vm1549, %v1543
        %1553 = vst.msk [vmem:[%s204 + $0x18] sm:$0xff] %vm1549, %v1544
        %1554 = vst.msk [vmem:[%s204 + $0x20] sm:$0xff] %vm1549, %v1545
        %1555 = vst.msk [vmem:[%s204 + $0x28] sm:$0xff] %vm1549, %v1546
        %1556 = vst.msk [vmem:[%s204 + $0x30] sm:$0xff] %vm1549, %v1547
        %1557 = vst.msk [vmem:[%s204 + $0x38] sm:$0xff] %vm1549, %v1548
        %v1558 = vsel %vm1549, %v1541, 0.0
        %v1559 = vsel %vm1549, %v1542, 0.0
        %v1560 = vadd.f32 %v1558, %v1559
        %v1561 = vsel %vm1549, %v1543, 0.0
        %v1562 = vadd.f32 %v1560, %v1561
        %v1563 = vsel %vm1549, %v1544, 0.0
        %v1564 = vadd.f32 %v1562, %v1563
        %v1565 = vsel %vm1549, %v1545, 0.0
        %v1566 = vadd.f32 %v1564, %v1565
        %v1567 = vsel %vm1549, %v1546, 0.0
        %v1568 = vadd.f32 %v1566, %v1567
        %v1569 = vsel %vm1549, %v1547, 0.0
        %v1570 = vadd.f32 %v1568, %v1569
        %v1571 = vsel %vm1549, %v1548, 0.0
        %v1572 = vadd.f32 %v1570, %v1571
        %v1573 = vrot.slane %v1572, 4
        %v1574 = vadd.f32 %v1572, %v1573
        %v1575 = vrot.slane %v1574, 2
        %v1576 = vadd.f32 %v1574, %v1575
        %v1577 = vrot.slane %v1576, 1
        %v1578 = vadd.f32 %v1576, %v1577
        %v1579 = vmul.f32 %v1541, %v1541
        %v1580 = vmul.f32 %v1542, %v1542
        %v1581 = vmul.f32 %v1543, %v1543
        %v1582 = vmul.f32 %v1544, %v1544
        %v1583 = vmul.f32 %v1545, %v1545
        %v1584 = vmul.f32 %v1546, %v1546
        %v1585 = vmul.f32 %v1547, %v1547
        %v1586 = vmul.f32 %v1548, %v1548
        %v1587 = vsel %vm1549, %v1579, 0.0
        %v1588 = vsel %vm1549, %v1580, 0.0
        %v1589 = vadd.f32 %v1587, %v1588
        %v1590 = vsel %vm1549, %v1581, 0.0
        %v1591 = vadd.f32 %v1589, %v1590
        %v1592 = vsel %vm1549, %v1582, 0.0
        %v1593 = vadd.f32 %v1591, %v1592
        %v1594 = vsel %vm1549, %v1583, 0.0
        %v1595 = vadd.f32 %v1593, %v1594
        %v1596 = vsel %vm1549, %v1584, 0.0
        %v1597 = vadd.f32 %v1595, %v1596
        %v1598 = vsel %vm1549, %v1585, 0.0
        %v1599 = vadd.f32 %v1597, %v1598
        %v1600 = vsel %vm1549, %v1586, 0.0
        %v1601 = vadd.f32 %v1599, %v1600
        %v1602 = vrot.slane %v1601, 4
        %v1603 = vadd.f32 %v1601, %v1602
        %v1604 = vrot.slane %v1603, 2
        %v1605 = vadd.f32 %v1603, %v1604
        %v1606 = vrot.slane %v1605, 1
        %v1607 = vadd.f32 %v1605, %v1606
        %vm1608 = vcmask 1040384
        %v1609 = vsel %vm1608, %v1578, %v1607
        %vm1610 = vcmask 58368
        %1611 = vst.msk [vmem:[%s191] sm:$0x3] %vm1610, %v1609
        %s1612 = sadd.s32 %s22, %s23
        %s1613 = smul.u32 8, %s1612
        %p1614 = scmp.lt.s32.totalorder %s1613, 15
        %s1615 = scalar_select %p1614, %s1613, 15
        %s1616 = smul.addr %s1615, 8
        %s1617 = scalar_lea.vmem %s2, %s1616
        %s1618 = sand.u32 %s115, 1
        %s1619 = scalar_lea.sflag [#allocation3], %s1618
        %s1620 = sand.u32 %s115, 1
        %s1621 = smul.addr %s1620, 2
        %s1622 = scalar_lea.vmem [#allocation2], %s1621
        // Predicated region
        $region29: #{tpu_custom_call.1} parent=27 // pred_check
          %p1623 = pneg %p97
        $region30: #{tpu_custom_call.1} parent=27 // pred_check_branch
          %1625 = sbr.rel (%p1623) target = $region32
        $region31: #{tpu_custom_call.1} parent=27 // pred_region
          %s1626 = sadd.s32 %s22, %s23
          %s1627 = smul.u32 8, %s1626
        $region32: #{tpu_custom_call.1} parent=27 // pred_fallthru
          _
        // Predicated region
        $region33: #{tpu_custom_call.1} parent=27 // pred_check
          %p1628 = pneg %p125
        $region34: #{tpu_custom_call.1} parent=27 // pred_check_branch
          %1630 = sbr.rel (%p1628) target = $region36
        $region35: #{tpu_custom_call.1} parent=27 // pred_region
          %s1631 = sadd.s32 %s22, %s23
          %s1633 = ssub.s32 32, 32
          %1634 = vsyncadd %s1619, %s1633
          %s1635 = smul.addr %s1631, 32
          %s1636 = scalar_lea.hbm %s3, %s1635
          %s1638 = sshll.u32 %s1622, 4
          %s1639 = int_to_ptr.vmem [resolvable:$true] %s1638
          %1641 = dma.vmem_to_hbm [thread:$0]  %s1639, 32, %s1636, %s1619
        $region36: #{tpu_custom_call.1} parent=27 // pred_fallthru
          _
      $region28: #{tpu_custom_call.1} parent=5 // pred_fallthru
        _
      %p1642 = scmp.le.s32.totalorder 2, %s13
      // Predicated region
      $region37: #{tpu_custom_call.1} parent=5 // pred_check
        %p1643 = pneg %p1642
      $region38: #{tpu_custom_call.1} parent=5 // pred_check_branch
        %1645 = sbr.rel (%p1643) target = $region40
      $region39: #{tpu_custom_call.1} parent=5 // pred_region
        %s1646 = ssub.s32 %s13, 2
        // Predicated region
        $region41: #{tpu_custom_call.1} parent=39 // pred_check
          %p1647 = pneg %p103
        $region42: #{tpu_custom_call.1} parent=39 // pred_check_branch
          %1649 = sbr.rel (%p1647) target = $region44
        $region43: #{tpu_custom_call.1} parent=39 // pred_region
          %s1650 = sadd.s32 %s24, %s25
          %s1651 = smul.u32 8, %s1650
          %p1652 = scmp.lt.s32.totalorder %s1651, 15
          %s1653 = scalar_select %p1652, %s1651, 15
          %s1654 = smul.addr %s1653, 8
          %s1655 = scalar_lea.vmem %s2, %s1654
        $region44: #{tpu_custom_call.1} parent=39 // pred_fallthru
          _
        // Predicated region
        $region45: #{tpu_custom_call.1} parent=39 // pred_check
          %p1656 = pneg %p131
        $region46: #{tpu_custom_call.1} parent=39 // pred_check_branch
          %1658 = sbr.rel (%p1656) target = $region48
        $region47: #{tpu_custom_call.1} parent=39 // pred_region
          %s1659 = sand.u32 %s116, 1
          %s1660 = scalar_lea.sflag [#allocation3], %s1659
          %s1661 = sand.u32 %s116, 1
          %s1662 = smul.addr %s1661, 2
          %s1663 = scalar_lea.vmem [#allocation2], %s1662
          %1664 = dma.done %s1660, 32
        $region48: #{tpu_custom_call.1} parent=39 // pred_fallthru
          _
      $region40: #{tpu_custom_call.1} parent=5 // pred_fallthru
        _
    $region6: #{tpu_custom_call.1} parent=1 // loop_footer
      %s17 = sadd.s32 1, %s13
    $region7: #{tpu_custom_call.1} parent=1 // loop_footer_branch
      %12 = sbr.rel target = $region3
    $region8: #{tpu_custom_call.1} parent=1 // loop_exit
      _
    %1665 = vsyncpa [#allocation3], 1
    %s1666 = scalar_lea.sflag [#allocation3], 1
    %1667 = vsyncpa %s1666, 1

</llo_original>
